<compile_context>
chip_gen: v5e
topology: v5e:2x2
jax: 0.10.0
libtpu: 0.0.40
codegen_flags: <defaults>
</compile_context>

<pallas_src>
import math

import jax
import jax.numpy as jnp
from jax.experimental import pallas as pl
from jax.experimental.pallas import tpu as pltpu

EPS = 1e-5                     # nn.BatchNorm3d default eps
LANES = 128                    # TPU vreg lane width
VMEM_LIMIT = 32 * 1024 * 1024  # <= physical VMEM on every TPU generation

# When True (set by the self-test, eager mode only), every Pallas conv block is
# checked against an XLA reference computed on the *same* block input.
_CHECK_WITH_XLA = False
_CHECK_ATOL = 2e-2
_CHECK_RTOL = 2e-2


# --------------------------------------------------------------------------
# Pallas kernels
# --------------------------------------------------------------------------
def _make_conv_bn_prelu_kernel(nt, tm, m_total, c_out, has_res, broadcast_res):
    """Fused im2col-matmul + BatchNorm3d(train) + PReLU (+ residual) kernel.

    grid=(nt,) over M tiles ("arbitrary"); the bf16 output block is
    VMEM-resident across the grid (constant index map).  Each step writes its
    conv tile and accumulates per-lane sum / sum(x^2) in f32 scratch; the last
    step normalizes + activates (+ residual) in (tm, 128) chunks.
    """
    inv_m = 1.0 / float(m_total)

    def kernel(patches_ref, w_ref, gamma_ref, beta_ref, alpha_ref, *rest):
        if has_res:
            res_ref = rest[0]
            o_ref, sum_ref, ssq_ref = rest[1:]
        else:
            res_ref = None
            o_ref, sum_ref, ssq_ref = rest

        i = pl.program_id(0)

        # ---- conv tile on the MXU (bf16 operands, f32 accumulation) --------
        acc = jnp.dot(patches_ref[...], w_ref[...],
                      preferred_element_type=jnp.float32)          # (tm, 128)

        if nt == 1:
            o_ref[...] = acc.astype(o_ref.dtype)
            sum_ref[...] = jnp.sum(acc, axis=0, keepdims=True)
            ssq_ref[...] = jnp.sum(acc * acc, axis=0, keepdims=True)
        else:
            @pl.when(i == 0)
            def _init():
                sum_ref[...] = jnp.zeros_like(sum_ref)
                ssq_ref[...] = jnp.zeros_like(ssq_ref)

            row0 = pl.multiple_of(i * tm, tm)
            o_ref[pl.ds(row0, tm), :] = acc.astype(o_ref.dtype)
            sum_ref[...] += jnp.sum(acc, axis=0, keepdims=True)
            ssq_ref[...] += jnp.sum(acc * acc, axis=0, keepdims=True)

        # ---- finalize: BN (one-pass stats) + PReLU (+ residual), tiled -----
        @pl.when(i == nt - 1)
        def _finalize():
            mean = sum_ref[...] * inv_m
            # TODO(synk): one-pass E[x^2]-mean^2 can cancel if |mean| >> std;
            # clamp keeps it safe for BN'd activations.
            var = jnp.maximum(ssq_ref[...] * inv_m - mean * mean, 0.0)
            scale = jax.lax.rsqrt(var + EPS) * gamma_ref[...]
            shift = beta_ref[...] - mean * scale
            alpha = alpha_ref[0]                    # scalar from SMEM

            def apply_chunk(y, r):
                y = y * scale + shift
                y = jnp.where(y >= 0.0, y, alpha * y)
                if r is not None:
                    if broadcast_res:               # (tm,1) -> first c_out lanes
                        lanes = jax.lax.broadcasted_iota(jnp.int32, y.shape, 1)
                        y = jnp.where(lanes < c_out, y + r, y)
                    else:                           # lane-dense rows, pads are 0
                        y = y + r
                return y

            if nt == 1:
                y = o_ref[...].astype(jnp.float32)
                r = res_ref[...].astype(jnp.float32) if has_res else None
                o_ref[...] = apply_chunk(y, r).astype(o_ref.dtype)
            else:
                def body(t, carry):
                    r0 = pl.multiple_of(t * tm, tm)
                    y = o_ref[pl.ds(r0, tm), :].astype(jnp.float32)
                    r = (res_ref[pl.ds(r0, tm), :].astype(jnp.float32)
                         if has_res else None)
                    o_ref[pl.ds(r0, tm), :] = apply_chunk(y, r).astype(o_ref.dtype)
                    return carry
                jax.lax.fori_loop(0, nt, body, 0)

    return kernel


def _conv_bias_kernel(patches_ref, w_ref, bias_ref, o_ref):
    """Plain Conv3d (im2col matmul) + bias, lane-dense f32 output."""
    o_ref[...] = (jnp.dot(patches_ref[...], w_ref[...],
                          preferred_element_type=jnp.float32) + bias_ref[...])


# --------------------------------------------------------------------------
# Small helpers
# --------------------------------------------------------------------------
def _round_up(x, m):
    return ((x + m - 1) // m) * m


def _choose_tile(m):
    # Multi-step grids (so patch DMA overlaps the matmul) for anything that is
    # not tiny; tiny blocks stay single-step.
    if m >= 2048 and m % 512 == 0:
        return 512
    if m >= 512 and m % 256 == 0:
        return 256
    return m


def _pad_lanes(v):
    return jnp.pad(v.astype(jnp.float32), (0, LANES - v.shape[0])).reshape(1, LANES)


def _im2col_ndhwc(x, k, stride, padding):
    """x: (N, D, H, W, C) -> patches (M, C*k^3) with K index = c*k^3 + tap."""
    n, d, h, w, c = x.shape
    if padding:
        x = jnp.pad(x, ((0, 0), (padding,) * 2, (padding,) * 2,
                        (padding,) * 2, (0, 0)))
    do = (d + 2 * padding - k) // stride + 1
    ho = (h + 2 * padding - k) // stride + 1
    wo = (w + 2 * padding - k) // stride + 1
    taps = []
    for dz in range(k):
        for dy in range(k):
            for dx in range(k):
                taps.append(x[:, dz:dz + do * stride:stride,
                              dy:dy + ho * stride:stride,
                              dx:dx + wo * stride:stride, :])
    cols = jnp.stack(taps, axis=-1)                 # (N, Do, Ho, Wo, C, k^3)
    return cols.reshape(n * do * ho * wo, c * k * k * k), (n, do, ho, wo)


def _assert_close(got, ref, name):
    err = float(jnp.max(jnp.abs(got - ref) - _CHECK_RTOL * jnp.abs(ref)))
    assert err <= _CHECK_ATOL, f"{name}: err {err:.3e}"


# --------------------------------------------------------------------------
# XLA references (used only for the per-block self-check)
# --------------------------------------------------------------------------
def _conv_ref(x_ndhwc, w, b, stride, padding):
    x = jnp.transpose(x_ndhwc, (0, 4, 1, 2, 3)).astype(jnp.bfloat16)
    y = jax.lax.conv_general_dilated(
        x, w.astype(jnp.bfloat16), window_strides=(stride,) * 3,
        padding=[(padding, padding)] * 3,
        dimension_numbers=("NCDHW", "OIDHW", "NCDHW"),
        preferred_element_type=jnp.float32)
    y = y + b.reshape(1, -1, 1, 1, 1)
    return jnp.transpose(y, (0, 2, 3, 4, 1))


def _conv_block_ref(x_ndhwc, p, stride, padding, res_ndhwc=None):
    x = jnp.transpose(x_ndhwc, (0, 4, 1, 2, 3)).astype(jnp.bfloat16)
    y = jax.lax.conv_general_dilated(
        x, p["w"].astype(jnp.bfloat16), window_strides=(stride,) * 3,
        padding=[(padding, padding)] * 3,
        dimension_numbers=("NCDHW", "OIDHW", "NCDHW"),
        preferred_element_type=jnp.float32)
    mean = jnp.mean(y, axis=(0, 2, 3, 4), keepdims=True)
    var = jnp.maximum(
        jnp.mean(y * y, axis=(0, 2, 3, 4), keepdims=True) - mean * mean, 0.0)
    yq = y.astype(jnp.bfloat16).astype(jnp.float32)   # mirror bf16 VMEM storage
    scale = jax.lax.rsqrt(var + EPS) * p["gamma"].reshape(1, -1, 1, 1, 1)
    shift = p["beta"].reshape(1, -1, 1, 1, 1) - mean * scale
    yn = yq * scale + shift
    yn = jnp.where(yn >= 0.0, yn, p["alpha"] * yn)
    yn = jnp.transpose(yn, (0, 2, 3, 4, 1))
    if res_ndhwc is not None:
        yn = yn + res_ndhwc
    return yn


# --------------------------------------------------------------------------
# Pallas wrappers
# --------------------------------------------------------------------------
def _fused_conv_block(x, p, stride, padding, residual=None, broadcast_res=False):
    """conv_block = Conv3d -> BatchNorm3d(train) -> PReLU (+ fused residual).

    x: (N, D, H, W, Cin) bf16.  residual: None, (M,1) bf16 (broadcast) or
    (M,128) bf16 lane-dense rows (direct add).
    Returns (rows (M, 128) bf16, out NDHWC bf16).
    """
    c_out, c_in, k = p["w"].shape[:3]
    assert c_out <= LANES
    patches, (n, do, ho, wo) = _im2col_ndhwc(x, k, stride, padding)
    m, k_real = patches.shape
    k_pad = _round_up(k_real, LANES)

    # lane/K-dense bf16 MXU operands (conv bias dropped: it cancels under BN)
    patches = jnp.pad(patches, ((0, 0), (0, k_pad - k_real))).astype(jnp.bfloat16)
    wmat = jnp.pad(p["w"].reshape(c_out, k_real).T,
                   ((0, k_pad - k_real), (0, LANES - c_out))).astype(jnp.bfloat16)
    gamma = _pad_lanes(p["gamma"])
    beta = _pad_lanes(p["beta"])
    alpha = jnp.reshape(p["alpha"].astype(jnp.float32), (1,))

    has_res = residual is not None
    tm = _choose_tile(m)
    nt = m // tm

    in_specs = [
        pl.BlockSpec((tm, k_pad), lambda i: (i, 0)),         # patches: M-tiled
        pl.BlockSpec((k_pad, LANES), lambda i: (0, 0)),      # weights: resident
        pl.BlockSpec((1, LANES), lambda i: (0, 0)),          # gamma
        pl.BlockSpec((1, LANES), lambda i: (0, 0)),          # beta
        pl.BlockSpec(memory_space=pltpu.MemorySpace.SMEM),   # alpha (scalar)
    ]
    args = [patches, wmat, gamma, beta, alpha]
    if has_res:
        assert residual.shape[0] == m
        residual = residual.astype(jnp.bfloat16)
        in_specs.append(pl.BlockSpec(residual.shape, lambda i: (0, 0)))
        args.append(residual)

    rows = pl.pallas_call(
        _make_conv_bn_prelu_kernel(nt, tm, m, c_out, has_res, broadcast_res),
        out_shape=jax.ShapeDtypeStruct((m, LANES), jnp.bfloat16),
        grid=(nt,),
        in_specs=in_specs,
        out_specs=pl.BlockSpec((m, LANES), lambda i: (0, 0)),  # resident output
        scratch_shapes=[pltpu.VMEM((1, LANES), jnp.float32),   # sum
                        pltpu.VMEM((1, LANES), jnp.float32)],  # sum(x^2)
        compiler_params=pltpu.CompilerParams(
            dimension_semantics=("arbitrary",),
            vmem_limit_bytes=VMEM_LIMIT),
    )(*args)

    out = rows[:, :c_out].reshape(n, do, ho, wo, c_out)

    if _CHECK_WITH_XLA:
        res_nd = None
        if has_res:
            r = residual.astype(jnp.float32)
            r = (jnp.broadcast_to(r[:, :1], (m, c_out)) if broadcast_res
                 else r[:, :c_out])
            res_nd = r.reshape(n, do, ho, wo, c_out)
        ref = _conv_block_ref(x, p, stride, padding, res_nd)
        _assert_close(out.astype(jnp.float32), ref,
                      f"conv_block {c_in}->{c_out} k={k} s={stride}")

    return rows, out


def _conv3d(x, w, b, padding):
    """Plain Conv3d + bias (fused key/value head)."""
    c_out, c_in, k = w.shape[:3]
    assert c_out <= LANES
    patches, (n, do, ho, wo) = _im2col_ndhwc(x, k, 1, padding)
    m, k_real = patches.shape
    k_pad = _round_up(k_real, LANES)
    patches = jnp.pad(patches, ((0, 0), (0, k_pad - k_real))).astype(jnp.bfloat16)
    wmat = jnp.pad(w.reshape(c_out, k_real).T,
                   ((0, k_pad - k_real), (0, LANES - c_out))).astype(jnp.bfloat16)
    bias = _pad_lanes(b)
    tm = _choose_tile(m)

    rows = pl.pallas_call(
        _conv_bias_kernel,
        out_shape=jax.ShapeDtypeStruct((m, LANES), jnp.float32),
        grid=(m // tm,),
        in_specs=[pl.BlockSpec((tm, k_pad), lambda i: (i, 0)),
                  pl.BlockSpec((k_pad, LANES), lambda i: (0, 0)),
                  pl.BlockSpec((1, LANES), lambda i: (0, 0))],
        out_specs=pl.BlockSpec((tm, LANES), lambda i: (i, 0)),
        compiler_params=pltpu.CompilerParams(
            dimension_semantics=("parallel",),
            vmem_limit_bytes=VMEM_LIMIT),
    )(patches, wmat, bias)

    out = rows[:, :c_out].reshape(n, do, ho, wo, c_out)

    if _CHECK_WITH_XLA:
        ref = _conv_ref(x, w, b, 1, padding)
        _assert_close(out, ref, f"conv3d {c_in}->{c_out}")
    return out


# --------------------------------------------------------------------------
# Module forward (ResBlock / DownsamplingConv / Encoder)
# --------------------------------------------------------------------------
def _res_block(x_ndhwc, x_rows, blocks):
    """ResBlock.forward (no skip input): conv_blocks(x) + x.expand(...)."""
    c_in = x_ndhwc.shape[-1]
    if x_rows is None:
        n, d, h, w, c = x_ndhwc.shape
        x_rows = x_ndhwc.reshape(n * d * h * w, c)     # raw (M, c_in) rows
    h_rows, h_nd = None, x_ndhwc
    for idx, bp in enumerate(blocks):
        last = idx == len(blocks) - 1
        # Residual add is fused into the last conv_block's kernel.  As in
        # PyTorch expand(), only c_in == 1 (lane broadcast) or c_in == c_out
        # (direct add of the previous block's lane-dense rows) occur here.
        res = x_rows if last else None
        bcast = last and c_in == 1
        h_rows, h_nd = _fused_conv_block(h_nd, bp, 1, 2, res, bcast)
    return h_rows, h_nd


def _downsampling_conv(x_ndhwc, x_rows, p, cfg):
    _, res_nd = _res_block(x_ndhwc, x_rows, p["res_block"])
    down_rows, down_nd = _fused_conv_block(
        res_nd, p["downconv"], cfg["downconv"]["stride"], 0)
    return res_nd, down_nd, down_rows


def encoder_apply(x_ncdhw, params, cfg):
    """Encoder.forward -> (key, value, skip1, skip2, skip3, skip4), NCDHW f32."""
    h = jnp.transpose(x_ncdhw, (0, 2, 3, 4, 1)).astype(jnp.bfloat16)  # NDHWC
    h_rows = None
    skips = []
    for name in ("layer1", "layer2", "layer3", "layer4"):
        skip, h, h_rows = _downsampling_conv(h, h_rows, params[name], cfg[name])
        skips.append(skip)
    _, out5 = _res_block(h, h_rows, params["layer5"]["res_block"])

    # key + value heads fused into one pallas_call (32 + 64 = 96 <= 128 lanes).
    ck = params["key_encoder"]["w"].shape[0]
    cv = params["value_encoder"]["w"].shape[0]
    w_kv = jnp.concatenate([params["key_encoder"]["w"],
                            params["value_encoder"]["w"]], axis=0)
    b_kv = jnp.concatenate([params["key_encoder"]["b"],
                            params["value_encoder"]["b"]], axis=0)
    kv = _conv3d(out5, w_kv, b_kv, 1)
    key, value = kv[..., :ck], kv[..., ck:ck + cv]

    def to_ncdhw(t):
        return jnp.transpose(t, (0, 4, 1, 2, 3)).astype(jnp.float32)

    return (to_ncdhw(key), to_ncdhw(value), to_ncdhw(skips[0]),
            to_ncdhw(skips[1]), to_ncdhw(skips[2]), to_ncdhw(skips[3]))


# --------------------------------------------------------------------------
# Deterministic synthetic parameters (shapes mirror the nn.Module __init__)
# --------------------------------------------------------------------------
def _init_conv(k, in_ch, out_ch, ksz):
    k1, k2 = jax.random.split(k)
    fan_in = in_ch * ksz ** 3
    w = jax.random.normal(k1, (out_ch, in_ch, ksz, ksz, ksz),
                          jnp.float32) / math.sqrt(fan_in)
    b = 0.01 * jax.random.normal(k2, (out_ch,), jnp.float32)
    return w, b


def _init_conv_block(k, in_ch, out_ch, ksz):
    w, b = _init_conv(k, in_ch, out_ch, ksz)
    return {"w": w, "b": b,
            "gamma": jnp.ones((out_ch,), jnp.float32),   # BatchNorm3d weight
            "beta": jnp.zeros((out_ch,), jnp.float32),   # BatchNorm3d bias
            "alpha": jnp.asarray(0.25, jnp.float32)}     # nn.PReLU default


def init_params(key, cfg):
    keys = iter(jax.random.split(key, 32))
    params = {}
    for name in ("layer1", "layer2", "layer3", "layer4", "layer5"):
        rb = cfg[name]["res_block"]
        layer = {"res_block": [
            _init_conv_block(next(keys), ic, oc, rb["kernel"])
            for ic, oc in zip(rb["input_channels"], rb["output_channels"])]}
        if "downconv" in cfg[name]:
            dc = cfg[name]["downconv"]
            layer["downconv"] = _init_conv_block(
                next(keys), dc["in_channels"], dc["out_channels"], dc["kernel"])
        params[name] = layer
    for name in ("key_encoder", "value_encoder"):
        c = cfg[name]
        w, b = _init_conv(next(keys), c["in_channels"], c["out_channels"],
                          c["kernel"])
        params[name] = {"w": w, "b": b}
    return params


# --------------------------------------------------------------------------
if __name__ == "__main__":
    cfg = {
        "layer1": {"res_block": {"input_channels": [1, 4],
                                 "output_channels": [4, 4], "kernel": 5},
                   "downconv": {"in_channels": 4, "out_channels": 8,
                                "kernel": 2, "stride": 2}},
        "layer2": {"res_block": {"input_channels": [8, 8],
                                 "output_channels": [8, 8], "kernel": 5},
                   "downconv": {"in_channels": 8, "out_channels": 16,
                                "kernel": 2, "stride": 2}},
        "layer3": {"res_block": {"input_channels": [16, 16],
                                 "output_channels": [16, 16], "kernel": 5},
                   "downconv": {"in_channels": 16, "out_channels": 32,
                                "kernel": 2, "stride": 2}},
        "layer4": {"res_block": {"input_channels": [32, 32],
                                 "output_channels": [32, 32], "kernel": 5},
                   "downconv": {"in_channels": 32, "out_channels": 64,
                                "kernel": 2, "stride": 2}},
        "layer5": {"res_block": {"input_channels": [64, 64],
                                 "output_channels": [64, 64], "kernel": 5}},
        "key_encoder": {"in_channels": 64, "out_channels": 32, "kernel": 3},
        "value_encoder": {"in_channels": 64, "out_channels": 64, "kernel": 3},
    }

    key = jax.random.PRNGKey(0)
    kparam, kx = jax.random.split(key)
    params = init_params(kparam, cfg)

    # NCDHW input like the PyTorch module: batch=2, 1 channel, 16^3 volume.
    x = jax.random.normal(kx, (2, 1, 16, 16, 16), jnp.float32)

    # 1) Eager run with every Pallas conv block checked against an XLA
    #    reference computed on the same block input.
    _CHECK_WITH_XLA = True
    outs = encoder_apply(x, params, cfg)
    jax.block_until_ready(outs)
    _CHECK_WITH_XLA = False

    # 2) jit-compiled run (checks off) must reproduce the eager result.
    fwd = jax.jit(lambda xx, pp: encoder_apply(xx, pp, cfg))
    outs_jit = fwd(x, params)
    jax.block_until_ready(outs_jit)

    names = ("key", "value", "skip1", "skip2", "skip3", "skip4")
    shapes = {"key": (2, 32, 1, 1, 1), "value": (2, 64, 1, 1, 1),
              "skip1": (2, 4, 16, 16, 16), "skip2": (2, 8, 8, 8, 8),
              "skip3": (2, 16, 4, 4, 4), "skip4": (2, 32, 2, 2, 2)}
    for nm, a, aj in zip(names, outs, outs_jit):
        assert a.shape == shapes[nm], (nm, a.shape)
        assert bool(jnp.all(jnp.isfinite(a))), nm
        assert bool(jnp.max(jnp.abs(a - aj)) <= 1e-2), nm

    print("KERNEL_OK")
</pallas_src>

<mosaic_0001>
module attributes {stable_mosaic.version = 11 : i64} {
  func.func @kernel(%arg0: i32, %arg1: memref<512x128xbf16, #tpu.memory_space<vmem>>, %arg2: memref<128x128xbf16, #tpu.memory_space<vmem>>, %arg3: memref<1x128xf32, #tpu.memory_space<vmem>>, %arg4: memref<1x128xf32, #tpu.memory_space<vmem>>, %arg5: memref<1xf32, #tpu.memory_space<smem>>, %arg6: memref<8192x128xbf16, #tpu.memory_space<vmem>>, %arg7: memref<1x128xf32, #tpu.memory_space<vmem>>, %arg8: memref<1x128xf32, #tpu.memory_space<vmem>>) attributes {dimension_semantics = [#tpu.dimension_semantics<arbitrary>], iteration_bounds = array<i64: 16>, scalar_prefetch = 0 : i64, scratch_operands = 2 : i64, tpu.core_type = #tpu.core_type<tc>, window_params = [{transform_indices = @transform_0, window_bounds = array<i64: 512, 128>}, {pipeline_mode = #tpu.pipeline_mode<synchronous>, transform_indices = @transform_1, window_bounds = array<i64: 128, 128>}, {pipeline_mode = #tpu.pipeline_mode<synchronous>, transform_indices = @transform_2, window_bounds = array<i64: 1, 128>}, {pipeline_mode = #tpu.pipeline_mode<synchronous>, transform_indices = @transform_3, window_bounds = array<i64: 1, 128>}, {transform_indices = @transform_4, window_bounds = array<i64: 1>}, {pipeline_mode = #tpu.pipeline_mode<synchronous>, transform_indices = @transform_5, window_bounds = array<i64: 8192, 128>}]} {
    %c0 = arith.constant 0 : index
    %c0_0 = arith.constant 0 : index
    %0 = vector.load %arg1[%c0, %c0_0] : memref<512x128xbf16, #tpu.memory_space<vmem>>, vector<512x128xbf16>
    %c0_1 = arith.constant 0 : index
    %c0_2 = arith.constant 0 : index
    %1 = vector.load %arg2[%c0_1, %c0_2] : memref<128x128xbf16, #tpu.memory_space<vmem>>, vector<128x128xbf16>
    %cst = arith.constant dense<0.000000e+00> : vector<512x128xf32>
    %2 = tpu.matmul %0, %1, %cst {dimension_numbers = #tpu.dot_dimension_numbers<[1], [0], [0], [1], [0, 0, 1, 1], [], []>} : vector<512x128xbf16>, vector<128x128xbf16>, vector<512x128xf32> -> vector<512x128xf32>
    %c0_i32 = arith.constant 0 : i32
    %3 = arith.cmpi eq, %arg0, %c0_i32 : i32
    %4 = arith.extui %3 : i1 to i32
    %c0_i32_3 = arith.constant 0 : i32
    %5 = arith.cmpi ne, %4, %c0_i32_3 : i32
    scf.if %5 {
      %cst_16 = arith.constant 0.000000e+00 : f32
      %25 = vector.broadcast %cst_16 : f32 to vector<1x128xf32>
      %c0_17 = arith.constant 0 : index
      %c0_18 = arith.constant 0 : index
      %26 = vector.load %arg7[%c0_17, %c0_18] : memref<1x128xf32, #tpu.memory_space<vmem>>, vector<1x128xf32>
      tpu.vector_store %arg7[%c0_17, %c0_18], %25 {strides = array<i32>} : memref<1x128xf32, #tpu.memory_space<vmem>>, vector<1x128xf32>,
      %cst_19 = arith.constant 0.000000e+00 : f32
      %27 = vector.broadcast %cst_19 : f32 to vector<1x128xf32>
      %c0_20 = arith.constant 0 : index
      %c0_21 = arith.constant 0 : index
      %28 = vector.load %arg8[%c0_20, %c0_21] : memref<1x128xf32, #tpu.memory_space<vmem>>, vector<1x128xf32>
      tpu.vector_store %arg8[%c0_20, %c0_21], %27 {strides = array<i32>} : memref<1x128xf32, #tpu.memory_space<vmem>>, vector<1x128xf32>,
    } else {
    }
    %c512_i32 = arith.constant 512 : i32
    %6 = arith.muli %arg0, %c512_i32 : i32
    %7 = tpu.assume_multiple %6, 512 : i32
    %8 = arith.truncf %2 : vector<512x128xf32> to vector<512x128xbf16>
    %9 = arith.index_cast %7 : i32 to index
    %c0_4 = arith.constant 0 : index
    %10 = vector.load %arg6[%9, %c0_4] : memref<8192x128xbf16, #tpu.memory_space<vmem>>, vector<512x128xbf16>
    tpu.vector_store %arg6[%9, %c0_4], %8 {strides = array<i32>} : memref<8192x128xbf16, #tpu.memory_space<vmem>>, vector<512x128xbf16>,
    %c0_5 = arith.constant 0 : index
    %c0_6 = arith.constant 0 : index
    %11 = vector.load %arg7[%c0_5, %c0_6] : memref<1x128xf32, #tpu.memory_space<vmem>>, vector<1x128xf32>
    %cst_7 = arith.constant dense<0.000000e+00> : vector<128xf32>
    %12 = vector.multi_reduction <add>, %2, %cst_7 [0] : vector<512x128xf32> to vector<128xf32>
    %13 = vector.shape_cast %12 : vector<128xf32> to vector<1x128xf32>
    %14 = arith.addf %11, %13 : vector<1x128xf32>
    %c0_8 = arith.constant 0 : index
    %c0_9 = arith.constant 0 : index
    %15 = vector.load %arg7[%c0_8, %c0_9] : memref<1x128xf32, #tpu.memory_space<vmem>>, vector<1x128xf32>
    tpu.vector_store %arg7[%c0_8, %c0_9], %14 {strides = array<i32>} : memref<1x128xf32, #tpu.memory_space<vmem>>, vector<1x128xf32>,
    %c0_10 = arith.constant 0 : index
    %c0_11 = arith.constant 0 : index
    %16 = vector.load %arg8[%c0_10, %c0_11] : memref<1x128xf32, #tpu.memory_space<vmem>>, vector<1x128xf32>
    %17 = arith.mulf %2, %2 : vector<512x128xf32>
    %cst_12 = arith.constant dense<0.000000e+00> : vector<128xf32>
    %18 = vector.multi_reduction <add>, %17, %cst_12 [0] : vector<512x128xf32> to vector<128xf32>
    %19 = vector.shape_cast %18 : vector<128xf32> to vector<1x128xf32>
    %20 = arith.addf %16, %19 : vector<1x128xf32>
    %c0_13 = arith.constant 0 : index
    %c0_14 = arith.constant 0 : index
    %21 = vector.load %arg8[%c0_13, %c0_14] : memref<1x128xf32, #tpu.memory_space<vmem>>, vector<1x128xf32>
    tpu.vector_store %arg8[%c0_13, %c0_14], %20 {strides = array<i32>} : memref<1x128xf32, #tpu.memory_space<vmem>>, vector<1x128xf32>,
    %c15_i32 = arith.constant 15 : i32
    %22 = arith.cmpi eq, %arg0, %c15_i32 : i32
    %23 = arith.extui %22 : i1 to i32
    %c0_i32_15 = arith.constant 0 : i32
    %24 = arith.cmpi ne, %23, %c0_i32_15 : i32
    scf.if %24 {
      %c0_16 = arith.constant 0 : index
      %c0_17 = arith.constant 0 : index
      %25 = vector.load %arg7[%c0_16, %c0_17] : memref<1x128xf32, #tpu.memory_space<vmem>>, vector<1x128xf32>
      %cst_18 = arith.constant 1.22070313E-4 : f32
      %26 = vector.broadcast %cst_18 : f32 to vector<1x128xf32>
      %27 = arith.mulf %25, %26 : vector<1x128xf32>
      %c0_19 = arith.constant 0 : index
      %c0_20 = arith.constant 0 : index
      %28 = vector.load %arg8[%c0_19, %c0_20] : memref<1x128xf32, #tpu.memory_space<vmem>>, vector<1x128xf32>
      %cst_21 = arith.constant 1.22070313E-4 : f32
      %29 = vector.broadcast %cst_21 : f32 to vector<1x128xf32>
      %30 = arith.mulf %28, %29 : vector<1x128xf32>
      %31 = arith.mulf %27, %27 : vector<1x128xf32>
      %32 = arith.subf %30, %31 : vector<1x128xf32>
      %cst_22 = arith.constant 0.000000e+00 : f32
      %33 = vector.broadcast %cst_22 : f32 to vector<1x128xf32>
      %34 = arith.maximumf %32, %33 : vector<1x128xf32>
      %cst_23 = arith.constant 9.99999974E-6 : f32
      %35 = vector.broadcast %cst_23 : f32 to vector<1x128xf32>
      %36 = arith.addf %34, %35 : vector<1x128xf32>
      %37 = math.rsqrt %36 : vector<1x128xf32>
      %c0_24 = arith.constant 0 : index
      %c0_25 = arith.constant 0 : index
      %38 = vector.load %arg3[%c0_24, %c0_25] : memref<1x128xf32, #tpu.memory_space<vmem>>, vector<1x128xf32>
      %39 = arith.mulf %37, %38 : vector<1x128xf32>
      %c0_26 = arith.constant 0 : index
      %c0_27 = arith.constant 0 : index
      %40 = vector.load %arg4[%c0_26, %c0_27] : memref<1x128xf32, #tpu.memory_space<vmem>>, vector<1x128xf32>
      %41 = arith.mulf %27, %39 : vector<1x128xf32>
      %42 = arith.subf %40, %41 : vector<1x128xf32>
      %c0_28 = arith.constant 0 : index
      %43 = memref.load %arg5[%c0_28] : memref<1xf32, #tpu.memory_space<smem>>
      %c0_i32_29 = arith.constant 0 : i32
      %c16_i32 = arith.constant 16 : i32
      %44 = arith.addi %c0_i32_29, %c16_i32 : i32
      %c1_i32 = arith.constant 1 : i32
      scf.for %arg9 = %c0_i32_29 to %44 step %c1_i32  : i32 {
        %c512_i32_31 = arith.constant 512 : i32
        %45 = arith.muli %arg9, %c512_i32_31 : i32
        %46 = tpu.assume_multiple %45, 512 : i32
        %47 = arith.index_cast %46 : i32 to index
        %c0_32 = arith.constant 0 : index
        %48 = vector.load %arg6[%47, %c0_32] : memref<8192x128xbf16, #tpu.memory_space<vmem>>, vector<512x128xbf16>
        %49 = arith.extf %48 : vector<512x128xbf16> to vector<512x128xf32>
        %50 = vector.broadcast %39 : vector<1x128xf32> to vector<512x128xf32>
        %51 = arith.mulf %49, %50 : vector<512x128xf32>
        %52 = vector.broadcast %42 : vector<1x128xf32> to vector<512x128xf32>
        %53 = arith.addf %51, %52 : vector<512x128xf32>
        %cst_33 = arith.constant 0.000000e+00 : f32
        %54 = vector.broadcast %cst_33 : f32 to vector<512x128xf32>
        %55 = arith.cmpf oge, %53, %54 : vector<512x128xf32>
        %56 = vector.broadcast %43 : f32 to vector<512x128xf32>
        %57 = arith.mulf %56, %53 : vector<512x128xf32>
        %58 = arith.select %55, %53, %57 : vector<512x128xi1>, vector<512x128xf32>
        %59 = arith.truncf %58 : vector<512x128xf32> to vector<512x128xbf16>
        %60 = arith.index_cast %46 : i32 to index
        %c0_34 = arith.constant 0 : index
        %61 = vector.load %arg6[%60, %c0_34] : memref<8192x128xbf16, #tpu.memory_space<vmem>>, vector<512x128xbf16>
        tpu.vector_store %arg6[%60, %c0_34], %59 {strides = array<i32>} : memref<8192x128xbf16, #tpu.memory_space<vmem>>, vector<512x128xbf16>,
      }
      %c16_i32_30 = arith.constant 16 : i32
    } else {
    }
    return
  }
  func.func @transform_0(%arg0: i32) -> (i32, i32) {
    %c0_i32 = arith.constant 0 : i32
    %c0_i32_0 = arith.constant 0 : i32
    return %arg0, %c0_i32 : i32, i32
  }
  func.func @transform_1(%arg0: i32) -> (i32, i32) {
    %c0_i32 = arith.constant 0 : i32
    %c0_i32_0 = arith.constant 0 : i32
    %c0_i32_1 = arith.constant 0 : i32
    return %c0_i32, %c0_i32_0 : i32, i32
  }
  func.func @transform_2(%arg0: i32) -> (i32, i32) {
    %c0_i32 = arith.constant 0 : i32
    %c0_i32_0 = arith.constant 0 : i32
    %c0_i32_1 = arith.constant 0 : i32
    return %c0_i32, %c0_i32_0 : i32, i32
  }
  func.func @transform_3(%arg0: i32) -> (i32, i32) {
    %c0_i32 = arith.constant 0 : i32
    %c0_i32_0 = arith.constant 0 : i32
    %c0_i32_1 = arith.constant 0 : i32
    return %c0_i32, %c0_i32_0 : i32, i32
  }
  func.func @transform_4(%arg0: i32) -> i32 {
    %c0_i32 = arith.constant 0 : i32
    %c0_i32_0 = arith.constant 0 : i32
    return %c0_i32 : i32
  }
  func.func @transform_5(%arg0: i32) -> (i32, i32) {
    %c0_i32 = arith.constant 0 : i32
    %c0_i32_0 = arith.constant 0 : i32
    %c0_i32_1 = arith.constant 0 : i32
    return %c0_i32, %c0_i32_0 : i32, i32
  }
}

</mosaic_0001>

<llo_original>
// kernel: tpu_custom_call.1
$region0: #{tpu_custom_call.1}
  #allocation0 [shape = 'u32[]', space=smem, size = 0x4, offset = 0x4, fixed_abs, tag = 'smem constant byte address 0x4 - core index']
  #allocation1 [shape = 'u32[72,128]{1,0:T(1,128)}', space=vmem, size = 0x9000, scoped, tag = 'internal scratch']
  #allocation2 [shape = 'f32[1,128]{1,0:T(1,128)}', space=vmem, size = 0x200, scoped, tag = 'scratch operand']
  #allocation3 [shape = 'f32[1,128]{1,0:T(1,128)}', space=vmem, size = 0x200, scoped, tag = 'scratch operand']
  #allocation4 [shape = 'f32[1]{0:T(128)S(6)}', space=smem, size = 0x200, scoped, tag = 'scoped memory for tpu_custom_call.1']
  %s0 = inlined_call_operand.hbm [shape: bf16[8192,128], index: 0, kind: input, shape index: {}]
  %s1 = inlined_call_operand.hbm [shape: bf16[128,128], index: 1, kind: input, shape index: {}]
  %s2 = inlined_call_operand.hbm [shape: f32[1,128], index: 2, kind: input, shape index: {}]
  %s3 = inlined_call_operand.hbm [shape: f32[1,128], index: 3, kind: input, shape index: {}]
  %s4 = inlined_call_operand.<no memory space> [shape: f32[1], index: 4, kind: input, shape index: {}]
  %s5 = inlined_call_operand.hbm [shape: bf16[8192,128], index: 5, kind: output, shape index: {}]
  %s6 = sld [smem:[#allocation0]]
  $region84: #{tpu_custom_call.1} parent=0
    _
  %s8 = ssub.s32 1, %s6
  %s9 = scalar_select 0, %s8, %s6
  %10 = sst [smem:[#allocation4]] %s4
  $region1: #{tpu_custom_call.1} parent=0
    #allocation5 [shape = 'u8[262144]{0}', space=vmem, size = 0x40000, scoped, tag = 'input window, operand 0']
    #allocation6 [shape = 's32[2]{0}', space=sflag, size = 0x8, scoped, tag = 'scoped memory for tpu_custom_call.1']
    #allocation7 [shape = 's32[2]{0}', space=sflag, size = 0x8, scoped, tag = 'scoped memory for tpu_custom_call.1']
    #allocation8 [shape = 'u8[32768]{0}', space=vmem, size = 0x8000, scoped, tag = 'input window, operand 1, single buffered']
    #allocation9 [shape = 's32[1]{0}', space=sflag, size = 0x4, scoped, tag = 'scoped memory for tpu_custom_call.1']
    #allocation10 [shape = 'u8[512]{0}', space=vmem, size = 0x400, scoped, tag = 'input window, operand 2, single buffered']
    #allocation11 [shape = 'u8[512]{0}', space=vmem, size = 0x400, scoped, tag = 'input window, operand 3, single buffered']
    #allocation12 [shape = 's32[1]{0}', space=sflag, size = 0x4, scoped, tag = 'scoped memory for tpu_custom_call.1']
    #allocation13 [shape = 'u8[2097152]{0}', space=vmem, size = 0x200000, scoped, tag = 'output window, operand 0, single buffered']
    %11 = vsyncpa [#allocation6], 0
    %s12 = scalar_lea.sflag [#allocation6], 1
    %13 = vsyncpa %s12, 0
    %14 = vsyncpa [#allocation9], 0
    %15 = vsyncpa [#allocation12], 0
    %16 = vsyncpa [#allocation7], 0
    loop: start=0, step=1, limit=18
    $region2: #{tpu_custom_call.1} parent=1 // loop_pre_header
      _
    $region3: #{tpu_custom_call.1} parent=1 // loop_header
      %s18 = sphi 0, %s22
      %p19 = scmp.ge.s32.totalorder %s18, 18
      %s28 = sphi 0, %s30
      %s31 = sphi 0, %s28
      %s32 = sphi 0, %s31
      %s48 = sphi 0, %s32
      %s52 = sphi 0, %s52
      %s54 = sphi 0, %s52
      %s55 = sphi 0, %s54
      %s69 = sphi 0, %s55
      %s73 = sphi 0, %s73
      %s75 = sphi 0, %s73
      %s76 = sphi 0, %s75
      %s90 = sphi 0, %s76
      %s94 = sphi 0, %s94
      %s96 = sphi 0, %s94
      %s97 = sphi 0, %s96
      %s111 = sphi 0, %s97
      %s115 = sphi 0, %s115
      %s117 = sphi 0, %s115
      %s118 = sphi 0, %s117
      %s132 = sphi 0, %s118
      %s136 = sphi 0, %s136
      %s138 = sphi 0, %s136
      %s139 = sphi 0, %s138
      %s153 = sphi 0, %s139
    $region4: #{tpu_custom_call.1} parent=1 // loop_header_branch
      %21 = sbr.rel (%p19) target = $region8
    $region5: #{tpu_custom_call.1} parent=1 // loop_body
      %s23 = ssub.s32 %s18, 1
      %s24 = ssub.s32 %s18, 2
      %s25 = sadd.s32 %s18, 1
      %s26 = ssub.s32 %s18, %s25
      %p27 = scmp.eq.s32.totalorder %s26, 0
      %s29 = sadd.s32 %s28, 1
      %s30 = scalar_select %p27, %s28, %s29
      %p33 = pneg %p27
      %p34 = scmp.eq.s32.totalorder %s18, 15
      %p35 = por %p33, %p34
      %p36 = scmp.ne.s32.totalorder %s28, %s31
      %p37 = scmp.eq.s32.totalorder %s18, 0
      %p38 = por %p36, %p37
      %p39 = scmp.ne.s32.totalorder %s28, %s31
      %p40 = scmp.eq.s32.totalorder %s23, 15
      %p41 = por %p39, %p40
      %p42 = scmp.ne.s32.totalorder %s31, %s32
      %p43 = scmp.eq.s32.totalorder %s23, 0
      %p44 = por %p42, %p43
      %p45 = scmp.ne.s32.totalorder %s31, %s32
      %p46 = scmp.eq.s32.totalorder %s24, 15
      %p47 = por %p45, %p46
      %p49 = scmp.ne.s32.totalorder %s32, %s48
      %p50 = scmp.eq.s32.totalorder %s24, 0
      %p51 = por %p49, %p50
      %s53 = sadd.s32 %s52, 1
      %p56 = scmp.eq.s32.totalorder %s18, 15
      %p57 = scmp.ne.s32.totalorder %s52, %s54
      %p58 = scmp.eq.s32.totalorder %s18, 0
      %p59 = por %p57, %p58
      %p60 = scmp.ne.s32.totalorder %s52, %s54
      %p61 = scmp.eq.s32.totalorder %s23, 15
      %p62 = por %p60, %p61
      %p63 = scmp.ne.s32.totalorder %s54, %s55
      %p64 = scmp.eq.s32.totalorder %s23, 0
      %p65 = por %p63, %p64
      %p66 = scmp.ne.s32.totalorder %s54, %s55
      %p67 = scmp.eq.s32.totalorder %s24, 15
      %p68 = por %p66, %p67
      %p70 = scmp.ne.s32.totalorder %s55, %s69
      %p71 = scmp.eq.s32.totalorder %s24, 0
      %p72 = por %p70, %p71
      %s74 = sadd.s32 %s73, 1
      %p77 = scmp.eq.s32.totalorder %s18, 15
      %p78 = scmp.ne.s32.totalorder %s73, %s75
      %p79 = scmp.eq.s32.totalorder %s18, 0
      %p80 = por %p78, %p79
      %p81 = scmp.ne.s32.totalorder %s73, %s75
      %p82 = scmp.eq.s32.totalorder %s23, 15
      %p83 = por %p81, %p82
      %p84 = scmp.ne.s32.totalorder %s75, %s76
      %p85 = scmp.eq.s32.totalorder %s23, 0
      %p86 = por %p84, %p85
      %p87 = scmp.ne.s32.totalorder %s75, %s76
      %p88 = scmp.eq.s32.totalorder %s24, 15
      %p89 = por %p87, %p88
      %p91 = scmp.ne.s32.totalorder %s76, %s90
      %p92 = scmp.eq.s32.totalorder %s24, 0
      %p93 = por %p91, %p92
      %s95 = sadd.s32 %s94, 1
      %p98 = scmp.eq.s32.totalorder %s18, 15
      %p99 = scmp.ne.s32.totalorder %s94, %s96
      %p100 = scmp.eq.s32.totalorder %s18, 0
      %p101 = por %p99, %p100
      %p102 = scmp.ne.s32.totalorder %s94, %s96
      %p103 = scmp.eq.s32.totalorder %s23, 15
      %p104 = por %p102, %p103
      %p105 = scmp.ne.s32.totalorder %s96, %s97
      %p106 = scmp.eq.s32.totalorder %s23, 0
      %p107 = por %p105, %p106
      %p108 = scmp.ne.s32.totalorder %s96, %s97
      %p109 = scmp.eq.s32.totalorder %s24, 15
      %p110 = por %p108, %p109
      %p112 = scmp.ne.s32.totalorder %s97, %s111
      %p113 = scmp.eq.s32.totalorder %s24, 0
      %p114 = por %p112, %p113
      %s116 = sadd.s32 %s115, 1
      %p119 = scmp.eq.s32.totalorder %s18, 15
      %p120 = scmp.ne.s32.totalorder %s115, %s117
      %p121 = scmp.eq.s32.totalorder %s18, 0
      %p122 = por %p120, %p121
      %p123 = scmp.ne.s32.totalorder %s115, %s117
      %p124 = scmp.eq.s32.totalorder %s23, 15
      %p125 = por %p123, %p124
      %p126 = scmp.ne.s32.totalorder %s117, %s118
      %p127 = scmp.eq.s32.totalorder %s23, 0
      %p128 = por %p126, %p127
      %p129 = scmp.ne.s32.totalorder %s117, %s118
      %p130 = scmp.eq.s32.totalorder %s24, 15
      %p131 = por %p129, %p130
      %p133 = scmp.ne.s32.totalorder %s118, %s132
      %p134 = scmp.eq.s32.totalorder %s24, 0
      %p135 = por %p133, %p134
      %s137 = sadd.s32 %s136, 1
      %p140 = scmp.eq.s32.totalorder %s18, 15
      %p141 = scmp.ne.s32.totalorder %s136, %s138
      %p142 = scmp.eq.s32.totalorder %s18, 0
      %p143 = por %p141, %p142
      %p144 = scmp.ne.s32.totalorder %s136, %s138
      %p145 = scmp.eq.s32.totalorder %s23, 15
      %p146 = por %p144, %p145
      %p147 = scmp.ne.s32.totalorder %s138, %s139
      %p148 = scmp.eq.s32.totalorder %s23, 0
      %p149 = por %p147, %p148
      %p150 = scmp.ne.s32.totalorder %s138, %s139
      %p151 = scmp.eq.s32.totalorder %s24, 15
      %p152 = por %p150, %p151
      %p154 = scmp.ne.s32.totalorder %s139, %s153
      %p155 = scmp.eq.s32.totalorder %s24, 0
      %p156 = por %p154, %p155
      %p157 = scmp.le.s32.totalorder 1, %s18
      %p158 = scmp.lt.s32.totalorder %s18, 17
      %p159 = pnand %p157, %p158
      %p160 = pneg %p159
      // Predicated region
      $region9: #{tpu_custom_call.1} parent=5 // pred_check
        _
      $region10: #{tpu_custom_call.1} parent=5 // pred_check_branch
        %162 = sbr.rel (%p159) target = $region12
      $region11: #{tpu_custom_call.1} parent=5 // pred_region
        %s163 = ssub.s32 %s18, 1
        // Predicated region
        $region13: #{tpu_custom_call.1} parent=11 // pred_check
          %p164 = pneg %p65
        $region14: #{tpu_custom_call.1} parent=11 // pred_check_branch
          %166 = sbr.rel (%p164) target = $region16
        $region15: #{tpu_custom_call.1} parent=11 // pred_region
          %168 = vsyncadd [#allocation9], 0
          %s169 = sshll.u32 %s1, 4
          %s170 = int_to_ptr.hbm [resolvable:$true] %s169
          %s171 = sshll.u32 [#allocation8], 4
          %s172 = int_to_ptr.vmem [resolvable:$true] %s171
          %177 = dma.hbm_to_vmem [thread:$0]  %s170, 1024, %s172, [#allocation9], 64, 64, 4
        $region16: #{tpu_custom_call.1} parent=11 // pred_fallthru
          _
        // Predicated region
        $region17: #{tpu_custom_call.1} parent=11 // pred_check
          %p178 = pneg %p86
        $region18: #{tpu_custom_call.1} parent=11 // pred_check_branch
          %180 = sbr.rel (%p178) target = $region20
        $region19: #{tpu_custom_call.1} parent=11 // pred_region
          %182 = vsyncadd [#allocation9], 0
          %s184 = sshll.u32 %s2, 4
          %s185 = int_to_ptr.hbm [resolvable:$true] %s184
          %s186 = sshll.u32 [#allocation10], 4
          %s187 = int_to_ptr.vmem [resolvable:$true] %s186
          %189 = dma.hbm_to_vmem [thread:$0]  %s185, 16, %s187, [#allocation9]
        $region20: #{tpu_custom_call.1} parent=11 // pred_fallthru
          _
        // Predicated region
        $region21: #{tpu_custom_call.1} parent=11 // pred_check
          %p190 = pneg %p107
        $region22: #{tpu_custom_call.1} parent=11 // pred_check_branch
          %192 = sbr.rel (%p190) target = $region24
        $region23: #{tpu_custom_call.1} parent=11 // pred_region
          %194 = vsyncadd [#allocation12], 0
          %s196 = sshll.u32 %s3, 4
          %s197 = int_to_ptr.hbm [resolvable:$true] %s196
          %s198 = sshll.u32 [#allocation11], 4
          %s199 = int_to_ptr.vmem [resolvable:$true] %s198
          %201 = dma.hbm_to_vmem [thread:$0]  %s197, 16, %s199, [#allocation12]
        $region24: #{tpu_custom_call.1} parent=11 // pred_fallthru
          _
        // Predicated region
        $region25: #{tpu_custom_call.1} parent=11 // pred_check
          %p202 = pneg %p128
        $region26: #{tpu_custom_call.1} parent=11 // pred_check_branch
          %204 = sbr.rel (%p202) target = $region28
        $region27: #{tpu_custom_call.1} parent=11 // pred_region
          _
        $region28: #{tpu_custom_call.1} parent=11 // pred_fallthru
          _
      $region12: #{tpu_custom_call.1} parent=5 // pred_fallthru
        _
      %p205 = scmp.lt.s32.totalorder %s18, 16
      // Predicated region
      $region29: #{tpu_custom_call.1} parent=5 // pred_check
        %p206 = pneg %p205
      $region30: #{tpu_custom_call.1} parent=5 // pred_check_branch
        %208 = sbr.rel (%p206) target = $region32
      $region31: #{tpu_custom_call.1} parent=5 // pred_region
        // Predicated region
        $region33: #{tpu_custom_call.1} parent=31 // pred_check
          %p209 = pneg %p38
        $region34: #{tpu_custom_call.1} parent=31 // pred_check_branch
          %211 = sbr.rel (%p209) target = $region36
        $region35: #{tpu_custom_call.1} parent=31 // pred_region
          %s212 = sand.u32 %s28, 1
          %s213 = scalar_lea.sflag [#allocation6], %s212
          %s214 = sand.u32 %s28, 1
          %s215 = smul.addr %s214, 256
          %s216 = scalar_lea.vmem [#allocation5], %s215
          %s217 = smul.u32 64, %s18
          %219 = vsyncadd %s213, 0
          %s220 = smul.addr %s217, 4
          %s221 = scalar_lea.hbm %s0, %s220
          %s222 = sshll.u32 %s221, 4
          %s223 = int_to_ptr.hbm [resolvable:$true] %s222
          %s224 = sshll.u32 %s216, 4
          %s225 = int_to_ptr.vmem [resolvable:$true] %s224
          %230 = dma.hbm_to_vmem [thread:$0]  %s223, 4096, %s225, %s213, 64, 64, 4
        $region36: #{tpu_custom_call.1} parent=31 // pred_fallthru
          _
      $region32: #{tpu_custom_call.1} parent=5 // pred_fallthru
        _
      %p231 = scmp.le.s32.totalorder 1, %s18
      %p232 = scmp.lt.s32.totalorder %s18, 17
      %p233 = pnand %p231, %p232
      %p234 = pneg %p233
      // Predicated region
      $region37: #{tpu_custom_call.1} parent=5 // pred_check
        _
      $region38: #{tpu_custom_call.1} parent=5 // pred_check_branch
        %236 = sbr.rel (%p233) target = $region40
      $region39: #{tpu_custom_call.1} parent=5 // pred_region
        %s237 = ssub.s32 %s18, 1
        %s238 = sand.u32 %s31, 1
        %s239 = scalar_lea.sflag [#allocation6], %s238
        %s240 = sand.u32 %s31, 1
        %s241 = smul.addr %s240, 256
        %s242 = scalar_lea.vmem [#allocation5], %s241
        // Predicated region
        $region41: #{tpu_custom_call.1} parent=39 // pred_check
          %p243 = pneg %p44
        $region42: #{tpu_custom_call.1} parent=39 // pred_check_branch
          %245 = sbr.rel (%p243) target = $region44
        $region43: #{tpu_custom_call.1} parent=39 // pred_region
          %247 = dma.done %s239, 4096
        $region44: #{tpu_custom_call.1} parent=39 // pred_fallthru
          _
        // Predicated region
        $region45: #{tpu_custom_call.1} parent=39 // pred_check
          %p248 = pneg %p65
        $region46: #{tpu_custom_call.1} parent=39 // pred_check_branch
          %250 = sbr.rel (%p248) target = $region48
        $region47: #{tpu_custom_call.1} parent=39 // pred_region
          %252 = dma.done [#allocation9], 1024
        $region48: #{tpu_custom_call.1} parent=39 // pred_fallthru
          _
        // Predicated region
        $region49: #{tpu_custom_call.1} parent=39 // pred_check
          %p253 = pneg %p86
        $region50: #{tpu_custom_call.1} parent=39 // pred_check_branch
          %255 = sbr.rel (%p253) target = $region52
        $region51: #{tpu_custom_call.1} parent=39 // pred_region
          %257 = dma.done [#allocation9], 16
        $region52: #{tpu_custom_call.1} parent=39 // pred_fallthru
          _
        // Predicated region
        $region53: #{tpu_custom_call.1} parent=39 // pred_check
          %p258 = pneg %p107
        $region54: #{tpu_custom_call.1} parent=39 // pred_check_branch
          %260 = sbr.rel (%p258) target = $region56
        $region55: #{tpu_custom_call.1} parent=39 // pred_region
          %262 = dma.done [#allocation12], 16
        $region56: #{tpu_custom_call.1} parent=39 // pred_fallthru
          _
        %s263 = sand.u32 %s31, 1
        %s264 = scalar_lea.sflag [#allocation6], %s263
        %s265 = sand.u32 %s31, 1
        %s266 = smul.addr %s265, 256
        %s267 = scalar_lea.vmem [#allocation5], %s266
        %p268 = pneg %p44
        %p269 = pneg %p41
        %p270 = pneg %p65
        %p271 = pneg %p62
        %p272 = pneg %p86
        %p273 = pneg %p83
        %p274 = pneg %p107
        %p275 = pneg %p104
        %p276 = pneg %p128
        %p277 = pneg %p125
        %p278 = pneg %p149
        %p279 = pneg %p146
        %s280 = smul.u32 64, %s23
        %v281 = vld [vmem:[%s242] sm:$0xf]
        %v282 = vld [vmem:[%s242 + $0x4] sm:$0xf]
        %v283 = vld [vmem:[%s242 + $0x8] sm:$0xf]
        %v284 = vld [vmem:[%s242 + $0xc] sm:$0xf]
        %v285 = vld [vmem:[%s242 + $0x10] sm:$0xf]
        %v286 = vld [vmem:[%s242 + $0x14] sm:$0xf]
        %v287 = vld [vmem:[%s242 + $0x18] sm:$0xf]
        %v288 = vld [vmem:[%s242 + $0x1c] sm:$0xf]
        %v289 = vld [vmem:[%s242 + $0x20] sm:$0xf]
        %v290 = vld [vmem:[%s242 + $0x24] sm:$0xf]
        %v291 = vld [vmem:[%s242 + $0x28] sm:$0xf]
        %v292 = vld [vmem:[%s242 + $0x2c] sm:$0xf]
        %v293 = vld [vmem:[%s242 + $0x30] sm:$0xf]
        %v294 = vld [vmem:[%s242 + $0x34] sm:$0xf]
        %v295 = vld [vmem:[%s242 + $0x38] sm:$0xf]
        %v296 = vld [vmem:[%s242 + $0x3c] sm:$0xf]
        %v297 = vld [vmem:[%s242 + $0x40] sm:$0xf]
        %v298 = vld [vmem:[%s242 + $0x44] sm:$0xf]
        %v299 = vld [vmem:[%s242 + $0x48] sm:$0xf]
        %v300 = vld [vmem:[%s242 + $0x4c] sm:$0xf]
        %v301 = vld [vmem:[%s242 + $0x50] sm:$0xf]
        %v302 = vld [vmem:[%s242 + $0x54] sm:$0xf]
        %v303 = vld [vmem:[%s242 + $0x58] sm:$0xf]
        %v304 = vld [vmem:[%s242 + $0x5c] sm:$0xf]
        %v305 = vld [vmem:[%s242 + $0x60] sm:$0xf]
        %v306 = vld [vmem:[%s242 + $0x64] sm:$0xf]
        %v307 = vld [vmem:[%s242 + $0x68] sm:$0xf]
        %v308 = vld [vmem:[%s242 + $0x6c] sm:$0xf]
        %v309 = vld [vmem:[%s242 + $0x70] sm:$0xf]
        %v310 = vld [vmem:[%s242 + $0x74] sm:$0xf]
        %v311 = vld [vmem:[%s242 + $0x78] sm:$0xf]
        %v312 = vld [vmem:[%s242 + $0x7c] sm:$0xf]
        %v313 = vld [vmem:[%s242 + $0x80] sm:$0xf]
        %v314 = vld [vmem:[%s242 + $0x84] sm:$0xf]
        %v315 = vld [vmem:[%s242 + $0x88] sm:$0xf]
        %v316 = vld [vmem:[%s242 + $0x8c] sm:$0xf]
        %v317 = vld [vmem:[%s242 + $0x90] sm:$0xf]
        %v318 = vld [vmem:[%s242 + $0x94] sm:$0xf]
        %v319 = vld [vmem:[%s242 + $0x98] sm:$0xf]
        %v320 = vld [vmem:[%s242 + $0x9c] sm:$0xf]
        %v321 = vld [vmem:[%s242 + $0xa0] sm:$0xf]
        %v322 = vld [vmem:[%s242 + $0xa4] sm:$0xf]
        %v323 = vld [vmem:[%s242 + $0xa8] sm:$0xf]
        %v324 = vld [vmem:[%s242 + $0xac] sm:$0xf]
        %v325 = vld [vmem:[%s242 + $0xb0] sm:$0xf]
        %v326 = vld [vmem:[%s242 + $0xb4] sm:$0xf]
        %v327 = vld [vmem:[%s242 + $0xb8] sm:$0xf]
        %v328 = vld [vmem:[%s242 + $0xbc] sm:$0xf]
        %v329 = vld [vmem:[%s242 + $0xc0] sm:$0xf]
        %v330 = vld [vmem:[%s242 + $0xc4] sm:$0xf]
        %v331 = vld [vmem:[%s242 + $0xc8] sm:$0xf]
        %v332 = vld [vmem:[%s242 + $0xcc] sm:$0xf]
        %v333 = vld [vmem:[%s242 + $0xd0] sm:$0xf]
        %v334 = vld [vmem:[%s242 + $0xd4] sm:$0xf]
        %v335 = vld [vmem:[%s242 + $0xd8] sm:$0xf]
        %v336 = vld [vmem:[%s242 + $0xdc] sm:$0xf]
        %v337 = vld [vmem:[%s242 + $0xe0] sm:$0xf]
        %v338 = vld [vmem:[%s242 + $0xe4] sm:$0xf]
        %v339 = vld [vmem:[%s242 + $0xe8] sm:$0xf]
        %v340 = vld [vmem:[%s242 + $0xec] sm:$0xf]
        %v341 = vld [vmem:[%s242 + $0xf0] sm:$0xf]
        %v342 = vld [vmem:[%s242 + $0xf4] sm:$0xf]
        %v343 = vld [vmem:[%s242 + $0xf8] sm:$0xf]
        %v344 = vld [vmem:[%s242 + $0xfc] sm:$0xf]
        %v345 = vld [vmem:[#allocation8] sm:$0xf]
        %v346 = vld [vmem:[#allocation8 + $0x4] sm:$0xf]
        %v347 = vld [vmem:[#allocation8 + $0x8] sm:$0xf]
        %v348 = vld [vmem:[#allocation8 + $0xc] sm:$0xf]
        %v349 = vld [vmem:[#allocation8 + $0x10] sm:$0xf]
        %v350 = vld [vmem:[#allocation8 + $0x14] sm:$0xf]
        %v351 = vld [vmem:[#allocation8 + $0x18] sm:$0xf]
        %v352 = vld [vmem:[#allocation8 + $0x1c] sm:$0xf]
        %v353 = vld [vmem:[#allocation8 + $0x20] sm:$0xf]
        %v354 = vld [vmem:[#allocation8 + $0x24] sm:$0xf]
        %v355 = vld [vmem:[#allocation8 + $0x28] sm:$0xf]
        %v356 = vld [vmem:[#allocation8 + $0x2c] sm:$0xf]
        %v357 = vld [vmem:[#allocation8 + $0x30] sm:$0xf]
        %v358 = vld [vmem:[#allocation8 + $0x34] sm:$0xf]
        %v359 = vld [vmem:[#allocation8 + $0x38] sm:$0xf]
        %v360 = vld [vmem:[#allocation8 + $0x3c] sm:$0xf]
        %v425 = vunpack.c.l.b16 %v281
        %v426 = vunpack.c.l.b16 %v282
        %v427 = vunpack.c.l.b16 %v283
        %v428 = vunpack.c.l.b16 %v284
        %v429 = vunpack.c.l.b16 %v285
        %v430 = vunpack.c.l.b16 %v286
        %v431 = vunpack.c.l.b16 %v287
        %v432 = vunpack.c.l.b16 %v288
        %v433 = vunpack.c.l.b16 %v289
        %v434 = vunpack.c.l.b16 %v290
        %v435 = vunpack.c.l.b16 %v291
        %v436 = vunpack.c.l.b16 %v292
        %v437 = vunpack.c.l.b16 %v293
        %v438 = vunpack.c.l.b16 %v294
        %v439 = vunpack.c.l.b16 %v295
        %v440 = vunpack.c.l.b16 %v296
        %v441 = vunpack.c.l.b16 %v297
        %v442 = vunpack.c.l.b16 %v298
        %v443 = vunpack.c.l.b16 %v299
        %v444 = vunpack.c.l.b16 %v300
        %v445 = vunpack.c.l.b16 %v301
        %v446 = vunpack.c.l.b16 %v302
        %v447 = vunpack.c.l.b16 %v303
        %v448 = vunpack.c.l.b16 %v304
        %v449 = vunpack.c.l.b16 %v305
        %v450 = vunpack.c.l.b16 %v306
        %v451 = vunpack.c.l.b16 %v307
        %v452 = vunpack.c.l.b16 %v308
        %v453 = vunpack.c.l.b16 %v309
        %v454 = vunpack.c.l.b16 %v310
        %v455 = vunpack.c.l.b16 %v311
        %v456 = vunpack.c.l.b16 %v312
        %v457 = vunpack.c.l.b16 %v313
        %v458 = vunpack.c.l.b16 %v314
        %v459 = vunpack.c.l.b16 %v315
        %v460 = vunpack.c.l.b16 %v316
        %v461 = vunpack.c.l.b16 %v317
        %v462 = vunpack.c.l.b16 %v318
        %v463 = vunpack.c.l.b16 %v319
        %v464 = vunpack.c.l.b16 %v320
        %v465 = vunpack.c.l.b16 %v321
        %v466 = vunpack.c.l.b16 %v322
        %v467 = vunpack.c.l.b16 %v323
        %v468 = vunpack.c.l.b16 %v324
        %v469 = vunpack.c.l.b16 %v325
        %v470 = vunpack.c.l.b16 %v326
        %v471 = vunpack.c.l.b16 %v327
        %v472 = vunpack.c.l.b16 %v328
        %v473 = vunpack.c.l.b16 %v329
        %v474 = vunpack.c.l.b16 %v330
        %v475 = vunpack.c.l.b16 %v331
        %v476 = vunpack.c.l.b16 %v332
        %v477 = vunpack.c.l.b16 %v333
        %v478 = vunpack.c.l.b16 %v334
        %v479 = vunpack.c.l.b16 %v335
        %v480 = vunpack.c.l.b16 %v336
        %v481 = vunpack.c.l.b16 %v337
        %v482 = vunpack.c.l.b16 %v338
        %v483 = vunpack.c.l.b16 %v339
        %v484 = vunpack.c.l.b16 %v340
        %v485 = vunpack.c.l.b16 %v341
        %v486 = vunpack.c.l.b16 %v342
        %v487 = vunpack.c.l.b16 %v343
        %v488 = vunpack.c.l.b16 %v344
        %v489 = vpack.c.b16 %v426, %v425
        %v490 = vpack.c.b16 %v428, %v427
        %v491 = vpack.c.b16 %v430, %v429
        %v492 = vpack.c.b16 %v432, %v431
        %v493 = vpack.c.b16 %v434, %v433
        %v494 = vpack.c.b16 %v436, %v435
        %v495 = vpack.c.b16 %v438, %v437
        %v496 = vpack.c.b16 %v440, %v439
        %v497 = vpack.c.b16 %v442, %v441
        %v498 = vpack.c.b16 %v444, %v443
        %v499 = vpack.c.b16 %v446, %v445
        %v500 = vpack.c.b16 %v448, %v447
        %v501 = vpack.c.b16 %v450, %v449
        %v502 = vpack.c.b16 %v452, %v451
        %v503 = vpack.c.b16 %v454, %v453
        %v504 = vpack.c.b16 %v456, %v455
        %v505 = vpack.c.b16 %v458, %v457
        %v506 = vpack.c.b16 %v460, %v459
        %v507 = vpack.c.b16 %v462, %v461
        %v508 = vpack.c.b16 %v464, %v463
        %v509 = vpack.c.b16 %v466, %v465
        %v510 = vpack.c.b16 %v468, %v467
        %v511 = vpack.c.b16 %v470, %v469
        %v512 = vpack.c.b16 %v472, %v471
        %v513 = vpack.c.b16 %v474, %v473
        %v514 = vpack.c.b16 %v476, %v475
        %v515 = vpack.c.b16 %v478, %v477
        %v516 = vpack.c.b16 %v480, %v479
        %v517 = vpack.c.b16 %v482, %v481
        %v518 = vpack.c.b16 %v484, %v483
        %v519 = vpack.c.b16 %v486, %v485
        %v520 = vpack.c.b16 %v488, %v487
        %v569 = vunpack.c.l.b16 %v345
        %v570 = vunpack.c.l.b16 %v346
        %v571 = vunpack.c.l.b16 %v347
        %v572 = vunpack.c.l.b16 %v348
        %v573 = vunpack.c.l.b16 %v349
        %v574 = vunpack.c.l.b16 %v350
        %v575 = vunpack.c.l.b16 %v351
        %v576 = vunpack.c.l.b16 %v352
        %v577 = vunpack.c.l.b16 %v353
        %v578 = vunpack.c.l.b16 %v354
        %v579 = vunpack.c.l.b16 %v355
        %v580 = vunpack.c.l.b16 %v356
        %v581 = vunpack.c.l.b16 %v357
        %v582 = vunpack.c.l.b16 %v358
        %v583 = vunpack.c.l.b16 %v359
        %v584 = vunpack.c.l.b16 %v360
        %v585 = vpack.c.b16 %v570, %v569
        %v586 = vpack.c.b16 %v572, %v571
        %v587 = vpack.c.b16 %v574, %v573
        %v588 = vpack.c.b16 %v576, %v575
        %v589 = vpack.c.b16 %v578, %v577
        %v590 = vpack.c.b16 %v580, %v579
        %v591 = vpack.c.b16 %v582, %v581
        %v592 = vpack.c.b16 %v584, %v583
        %601 = vmatpush.bf16.msra.mxu0 %v592
        %602 = vmatpush.bf16.msra.mxu0 %v591
        %603 = vmatpush.bf16.msra.mxu0 %v590
        %604 = vmatpush.bf16.msra.mxu0 %v589
        %605 = vmatpush.bf16.msra.mxu0 %v588
        %606 = vmatpush.bf16.msra.mxu0 %v587
        %607 = vmatpush.bf16.msra.mxu0 %v586
        %608 = vmatpush.bf16.msra.mxu0 %v585
        %609 = vmatmul.bf16.gmra.mxu0 %v489
        %v610 = vpop.f32.mrf.mxu0
        %v611 = vadd.f32 0.0, %v610
        %v612 = vpop.f32.mrf.mxu0
        %v613 = vadd.f32 0.0, %v612
        %614 = vmatmul.bf16.gmra.mxu0 %v490
        %v615 = vpop.f32.mrf.mxu0
        %v616 = vadd.f32 0.0, %v615
        %v617 = vpop.f32.mrf.mxu0
        %v618 = vadd.f32 0.0, %v617
        %619 = vmatmul.bf16.gmra.mxu0 %v491
        %v620 = vpop.f32.mrf.mxu0
        %v621 = vadd.f32 0.0, %v620
        %v622 = vpop.f32.mrf.mxu0
        %v623 = vadd.f32 0.0, %v622
        %624 = vmatmul.bf16.gmra.mxu0 %v492
        %v625 = vpop.f32.mrf.mxu0
        %v626 = vadd.f32 0.0, %v625
        %v627 = vpop.f32.mrf.mxu0
        %v628 = vadd.f32 0.0, %v627
        %629 = vmatmul.bf16.gmra.mxu0 %v493
        %v630 = vpop.f32.mrf.mxu0
        %v631 = vadd.f32 0.0, %v630
        %v632 = vpop.f32.mrf.mxu0
        %v633 = vadd.f32 0.0, %v632
        %634 = vmatmul.bf16.gmra.mxu0 %v494
        %v635 = vpop.f32.mrf.mxu0
        %v636 = vadd.f32 0.0, %v635
        %v637 = vpop.f32.mrf.mxu0
        %v638 = vadd.f32 0.0, %v637
        %639 = vmatmul.bf16.gmra.mxu0 %v495
        %v640 = vpop.f32.mrf.mxu0
        %v641 = vadd.f32 0.0, %v640
        %v642 = vpop.f32.mrf.mxu0
        %v643 = vadd.f32 0.0, %v642
        %644 = vmatmul.bf16.gmra.mxu0 %v496
        %v645 = vpop.f32.mrf.mxu0
        %v646 = vadd.f32 0.0, %v645
        %v647 = vpop.f32.mrf.mxu0
        %v648 = vadd.f32 0.0, %v647
        %649 = vmatmul.bf16.gmra.mxu0 %v497
        %v650 = vpop.f32.mrf.mxu0
        %v651 = vadd.f32 0.0, %v650
        %v652 = vpop.f32.mrf.mxu0
        %v653 = vadd.f32 0.0, %v652
        %654 = vmatmul.bf16.gmra.mxu0 %v498
        %v655 = vpop.f32.mrf.mxu0
        %v656 = vadd.f32 0.0, %v655
        %v657 = vpop.f32.mrf.mxu0
        %v658 = vadd.f32 0.0, %v657
        %659 = vmatmul.bf16.gmra.mxu0 %v499
        %v660 = vpop.f32.mrf.mxu0
        %v661 = vadd.f32 0.0, %v660
        %v662 = vpop.f32.mrf.mxu0
        %v663 = vadd.f32 0.0, %v662
        %664 = vmatmul.bf16.gmra.mxu0 %v500
        %v665 = vpop.f32.mrf.mxu0
        %v666 = vadd.f32 0.0, %v665
        %v667 = vpop.f32.mrf.mxu0
        %v668 = vadd.f32 0.0, %v667
        %669 = vmatmul.bf16.gmra.mxu0 %v501
        %v670 = vpop.f32.mrf.mxu0
        %v671 = vadd.f32 0.0, %v670
        %v672 = vpop.f32.mrf.mxu0
        %v673 = vadd.f32 0.0, %v672
        %674 = vmatmul.bf16.gmra.mxu0 %v502
        %v675 = vpop.f32.mrf.mxu0
        %v676 = vadd.f32 0.0, %v675
        %v677 = vpop.f32.mrf.mxu0
        %v678 = vadd.f32 0.0, %v677
        %679 = vmatmul.bf16.gmra.mxu0 %v503
        %v680 = vpop.f32.mrf.mxu0
        %v681 = vadd.f32 0.0, %v680
        %v682 = vpop.f32.mrf.mxu0
        %v683 = vadd.f32 0.0, %v682
        %684 = vmatmul.bf16.gmra.mxu0 %v504
        %v685 = vpop.f32.mrf.mxu0
        %v686 = vadd.f32 0.0, %v685
        %v687 = vpop.f32.mrf.mxu0
        %v688 = vadd.f32 0.0, %v687
        %689 = vmatmul.bf16.gmra.mxu0 %v505
        %v690 = vpop.f32.mrf.mxu0
        %v691 = vadd.f32 0.0, %v690
        %v692 = vpop.f32.mrf.mxu0
        %v693 = vadd.f32 0.0, %v692
        %694 = vmatmul.bf16.gmra.mxu0 %v506
        %v695 = vpop.f32.mrf.mxu0
        %v696 = vadd.f32 0.0, %v695
        %v697 = vpop.f32.mrf.mxu0
        %v698 = vadd.f32 0.0, %v697
        %699 = vmatmul.bf16.gmra.mxu0 %v507
        %v700 = vpop.f32.mrf.mxu0
        %v701 = vadd.f32 0.0, %v700
        %v702 = vpop.f32.mrf.mxu0
        %v703 = vadd.f32 0.0, %v702
        %704 = vmatmul.bf16.gmra.mxu0 %v508
        %v705 = vpop.f32.mrf.mxu0
        %v706 = vadd.f32 0.0, %v705
        %v707 = vpop.f32.mrf.mxu0
        %v708 = vadd.f32 0.0, %v707
        %709 = vmatmul.bf16.gmra.mxu0 %v509
        %v710 = vpop.f32.mrf.mxu0
        %v711 = vadd.f32 0.0, %v710
        %v712 = vpop.f32.mrf.mxu0
        %v713 = vadd.f32 0.0, %v712
        %714 = vmatmul.bf16.gmra.mxu0 %v510
        %v715 = vpop.f32.mrf.mxu0
        %v716 = vadd.f32 0.0, %v715
        %v717 = vpop.f32.mrf.mxu0
        %v718 = vadd.f32 0.0, %v717
        %719 = vmatmul.bf16.gmra.mxu0 %v511
        %v720 = vpop.f32.mrf.mxu0
        %v721 = vadd.f32 0.0, %v720
        %v722 = vpop.f32.mrf.mxu0
        %v723 = vadd.f32 0.0, %v722
        %724 = vmatmul.bf16.gmra.mxu0 %v512
        %v725 = vpop.f32.mrf.mxu0
        %v726 = vadd.f32 0.0, %v725
        %v727 = vpop.f32.mrf.mxu0
        %v728 = vadd.f32 0.0, %v727
        %729 = vmatmul.bf16.gmra.mxu0 %v513
        %v730 = vpop.f32.mrf.mxu0
        %v731 = vadd.f32 0.0, %v730
        %v732 = vpop.f32.mrf.mxu0
        %v733 = vadd.f32 0.0, %v732
        %734 = vmatmul.bf16.gmra.mxu0 %v514
        %v735 = vpop.f32.mrf.mxu0
        %v736 = vadd.f32 0.0, %v735
        %v737 = vpop.f32.mrf.mxu0
        %v738 = vadd.f32 0.0, %v737
        %739 = vmatmul.bf16.gmra.mxu0 %v515
        %v740 = vpop.f32.mrf.mxu0
        %v741 = vadd.f32 0.0, %v740
        %v742 = vpop.f32.mrf.mxu0
        %v743 = vadd.f32 0.0, %v742
        %744 = vmatmul.bf16.gmra.mxu0 %v516
        %v745 = vpop.f32.mrf.mxu0
        %v746 = vadd.f32 0.0, %v745
        %v747 = vpop.f32.mrf.mxu0
        %v748 = vadd.f32 0.0, %v747
        %749 = vmatmul.bf16.gmra.mxu0 %v517
        %v750 = vpop.f32.mrf.mxu0
        %v751 = vadd.f32 0.0, %v750
        %v752 = vpop.f32.mrf.mxu0
        %v753 = vadd.f32 0.0, %v752
        %754 = vmatmul.bf16.gmra.mxu0 %v518
        %v755 = vpop.f32.mrf.mxu0
        %v756 = vadd.f32 0.0, %v755
        %v757 = vpop.f32.mrf.mxu0
        %v758 = vadd.f32 0.0, %v757
        %759 = vmatmul.bf16.gmra.mxu0 %v519
        %v760 = vpop.f32.mrf.mxu0
        %v761 = vadd.f32 0.0, %v760
        %v762 = vpop.f32.mrf.mxu0
        %v763 = vadd.f32 0.0, %v762
        %764 = vmatmul.bf16.gmra.mxu0 %v520
        %v765 = vpop.f32.mrf.mxu0
        %v766 = vadd.f32 0.0, %v765
        %v767 = vpop.f32.mrf.mxu0
        %v768 = vadd.f32 0.0, %v767
        %769 = vdwg.mxu0
        %p770 = scmp.eq.s32.totalorder %s23, 0
        // Predicated region
        $region57: #{tpu_custom_call.1} parent=39 // pred_check
          %p771 = pneg %p770
        $region58: #{tpu_custom_call.1} parent=39 // pred_check_branch
          %773 = sbr.rel (%p771) target = $region60
        $region59: #{tpu_custom_call.1} parent=39 // pred_region
          %774 = vst [vmem:[#allocation2] sm:$0x1] 0.0
          %775 = vst [vmem:[#allocation3] sm:$0x1] 0.0
        $region60: #{tpu_custom_call.1} parent=39 // pred_fallthru
          _
        %s776 = smul.u32 %s23, 512
        %v777 = vpack.c.bf16 %v611, %v611
        %v778 = vpack.c.bf16 %v613, %v613
        %v779 = vpack.c.bf16 %v616, %v616
        %v780 = vpack.c.bf16 %v618, %v618
        %v781 = vpack.c.bf16 %v621, %v621
        %v782 = vpack.c.bf16 %v623, %v623
        %v783 = vpack.c.bf16 %v626, %v626
        %v784 = vpack.c.bf16 %v628, %v628
        %v785 = vpack.c.bf16 %v631, %v631
        %v786 = vpack.c.bf16 %v633, %v633
        %v787 = vpack.c.bf16 %v636, %v636
        %v788 = vpack.c.bf16 %v638, %v638
        %v789 = vpack.c.bf16 %v641, %v641
        %v790 = vpack.c.bf16 %v643, %v643
        %v791 = vpack.c.bf16 %v646, %v646
        %v792 = vpack.c.bf16 %v648, %v648
        %v793 = vpack.c.bf16 %v651, %v651
        %v794 = vpack.c.bf16 %v653, %v653
        %v795 = vpack.c.bf16 %v656, %v656
        %v796 = vpack.c.bf16 %v658, %v658
        %v797 = vpack.c.bf16 %v661, %v661
        %v798 = vpack.c.bf16 %v663, %v663
        %v799 = vpack.c.bf16 %v666, %v666
        %v800 = vpack.c.bf16 %v668, %v668
        %v801 = vpack.c.bf16 %v671, %v671
        %v802 = vpack.c.bf16 %v673, %v673
        %v803 = vpack.c.bf16 %v676, %v676
        %v804 = vpack.c.bf16 %v678, %v678
        %v805 = vpack.c.bf16 %v681, %v681
        %v806 = vpack.c.bf16 %v683, %v683
        %v807 = vpack.c.bf16 %v686, %v686
        %v808 = vpack.c.bf16 %v688, %v688
        %v809 = vpack.c.bf16 %v691, %v691
        %v810 = vpack.c.bf16 %v693, %v693
        %v811 = vpack.c.bf16 %v696, %v696
        %v812 = vpack.c.bf16 %v698, %v698
        %v813 = vpack.c.bf16 %v701, %v701
        %v814 = vpack.c.bf16 %v703, %v703
        %v815 = vpack.c.bf16 %v706, %v706
        %v816 = vpack.c.bf16 %v708, %v708
        %v817 = vpack.c.bf16 %v711, %v711
        %v818 = vpack.c.bf16 %v713, %v713
        %v819 = vpack.c.bf16 %v716, %v716
        %v820 = vpack.c.bf16 %v718, %v718
        %v821 = vpack.c.bf16 %v721, %v721
        %v822 = vpack.c.bf16 %v723, %v723
        %v823 = vpack.c.bf16 %v726, %v726
        %v824 = vpack.c.bf16 %v728, %v728
        %v825 = vpack.c.bf16 %v731, %v731
        %v826 = vpack.c.bf16 %v733, %v733
        %v827 = vpack.c.bf16 %v736, %v736
        %v828 = vpack.c.bf16 %v738, %v738
        %v829 = vpack.c.bf16 %v741, %v741
        %v830 = vpack.c.bf16 %v743, %v743
        %v831 = vpack.c.bf16 %v746, %v746
        %v832 = vpack.c.bf16 %v748, %v748
        %v833 = vpack.c.bf16 %v751, %v751
        %v834 = vpack.c.bf16 %v753, %v753
        %v835 = vpack.c.bf16 %v756, %v756
        %v836 = vpack.c.bf16 %v758, %v758
        %v837 = vpack.c.bf16 %v761, %v761
        %v838 = vpack.c.bf16 %v763, %v763
        %v839 = vpack.c.bf16 %v766, %v766
        %v840 = vpack.c.bf16 %v768, %v768
        %s841 = sshra.s32 %s776, 3
        %s842 = sand.u32 %s776, 7
        %s843 = smul.addr %s841, 4
        %s844 = scalar_lea.vmem [#allocation13], %s843
        %845 = vst [vmem:[%s844] sm:$0xf] %v777
        %846 = vst [vmem:[%s844 + $0x4] sm:$0xf] %v778
        %847 = vst [vmem:[%s844 + $0x8] sm:$0xf] %v779
        %848 = vst [vmem:[%s844 + $0xc] sm:$0xf] %v780
        %849 = vst [vmem:[%s844 + $0x10] sm:$0xf] %v781
        %850 = vst [vmem:[%s844 + $0x14] sm:$0xf] %v782
        %851 = vst [vmem:[%s844 + $0x18] sm:$0xf] %v783
        %852 = vst [vmem:[%s844 + $0x1c] sm:$0xf] %v784
        %853 = vst [vmem:[%s844 + $0x20] sm:$0xf] %v785
        %854 = vst [vmem:[%s844 + $0x24] sm:$0xf] %v786
        %855 = vst [vmem:[%s844 + $0x28] sm:$0xf] %v787
        %856 = vst [vmem:[%s844 + $0x2c] sm:$0xf] %v788
        %857 = vst [vmem:[%s844 + $0x30] sm:$0xf] %v789
        %858 = vst [vmem:[%s844 + $0x34] sm:$0xf] %v790
        %859 = vst [vmem:[%s844 + $0x38] sm:$0xf] %v791
        %860 = vst [vmem:[%s844 + $0x3c] sm:$0xf] %v792
        %861 = vst [vmem:[%s844 + $0x40] sm:$0xf] %v793
        %862 = vst [vmem:[%s844 + $0x44] sm:$0xf] %v794
        %863 = vst [vmem:[%s844 + $0x48] sm:$0xf] %v795
        %864 = vst [vmem:[%s844 + $0x4c] sm:$0xf] %v796
        %865 = vst [vmem:[%s844 + $0x50] sm:$0xf] %v797
        %866 = vst [vmem:[%s844 + $0x54] sm:$0xf] %v798
        %867 = vst [vmem:[%s844 + $0x58] sm:$0xf] %v799
        %868 = vst [vmem:[%s844 + $0x5c] sm:$0xf] %v800
        %869 = vst [vmem:[%s844 + $0x60] sm:$0xf] %v801
        %870 = vst [vmem:[%s844 + $0x64] sm:$0xf] %v802
        %871 = vst [vmem:[%s844 + $0x68] sm:$0xf] %v803
        %872 = vst [vmem:[%s844 + $0x6c] sm:$0xf] %v804
        %873 = vst [vmem:[%s844 + $0x70] sm:$0xf] %v805
        %874 = vst [vmem:[%s844 + $0x74] sm:$0xf] %v806
        %875 = vst [vmem:[%s844 + $0x78] sm:$0xf] %v807
        %876 = vst [vmem:[%s844 + $0x7c] sm:$0xf] %v808
        %877 = vst [vmem:[%s844 + $0x80] sm:$0xf] %v809
        %878 = vst [vmem:[%s844 + $0x84] sm:$0xf] %v810
        %879 = vst [vmem:[%s844 + $0x88] sm:$0xf] %v811
        %880 = vst [vmem:[%s844 + $0x8c] sm:$0xf] %v812
        %881 = vst [vmem:[%s844 + $0x90] sm:$0xf] %v813
        %882 = vst [vmem:[%s844 + $0x94] sm:$0xf] %v814
        %883 = vst [vmem:[%s844 + $0x98] sm:$0xf] %v815
        %884 = vst [vmem:[%s844 + $0x9c] sm:$0xf] %v816
        %885 = vst [vmem:[%s844 + $0xa0] sm:$0xf] %v817
        %886 = vst [vmem:[%s844 + $0xa4] sm:$0xf] %v818
        %887 = vst [vmem:[%s844 + $0xa8] sm:$0xf] %v819
        %888 = vst [vmem:[%s844 + $0xac] sm:$0xf] %v820
        %889 = vst [vmem:[%s844 + $0xb0] sm:$0xf] %v821
        %890 = vst [vmem:[%s844 + $0xb4] sm:$0xf] %v822
        %891 = vst [vmem:[%s844 + $0xb8] sm:$0xf] %v823
        %892 = vst [vmem:[%s844 + $0xbc] sm:$0xf] %v824
        %893 = vst [vmem:[%s844 + $0xc0] sm:$0xf] %v825
        %894 = vst [vmem:[%s844 + $0xc4] sm:$0xf] %v826
        %895 = vst [vmem:[%s844 + $0xc8] sm:$0xf] %v827
        %896 = vst [vmem:[%s844 + $0xcc] sm:$0xf] %v828
        %897 = vst [vmem:[%s844 + $0xd0] sm:$0xf] %v829
        %898 = vst [vmem:[%s844 + $0xd4] sm:$0xf] %v830
        %899 = vst [vmem:[%s844 + $0xd8] sm:$0xf] %v831
        %900 = vst [vmem:[%s844 + $0xdc] sm:$0xf] %v832
        %901 = vst [vmem:[%s844 + $0xe0] sm:$0xf] %v833
        %902 = vst [vmem:[%s844 + $0xe4] sm:$0xf] %v834
        %903 = vst [vmem:[%s844 + $0xe8] sm:$0xf] %v835
        %904 = vst [vmem:[%s844 + $0xec] sm:$0xf] %v836
        %905 = vst [vmem:[%s844 + $0xf0] sm:$0xf] %v837
        %906 = vst [vmem:[%s844 + $0xf4] sm:$0xf] %v838
        %907 = vst [vmem:[%s844 + $0xf8] sm:$0xf] %v839
        %908 = vst [vmem:[%s844 + $0xfc] sm:$0xf] %v840
        %v909 = vld [vmem:[#allocation2] sm:$0x1]
        %v910 = vadd.f32 %v611, %v613
        %v911 = vadd.f32 %v910, %v616
        %v912 = vadd.f32 %v911, %v618
        %v913 = vadd.f32 %v912, %v621
        %v914 = vadd.f32 %v913, %v623
        %v915 = vadd.f32 %v914, %v626
        %v916 = vadd.f32 %v915, %v628
        %v917 = vadd.f32 %v916, %v631
        %v918 = vadd.f32 %v917, %v633
        %v919 = vadd.f32 %v918, %v636
        %v920 = vadd.f32 %v919, %v638
        %v921 = vadd.f32 %v920, %v641
        %v922 = vadd.f32 %v921, %v643
        %v923 = vadd.f32 %v922, %v646
        %v924 = vadd.f32 %v923, %v648
        %v925 = vadd.f32 %v924, %v651
        %v926 = vadd.f32 %v925, %v653
        %v927 = vadd.f32 %v926, %v656
        %v928 = vadd.f32 %v927, %v658
        %v929 = vadd.f32 %v928, %v661
        %v930 = vadd.f32 %v929, %v663
        %v931 = vadd.f32 %v930, %v666
        %v932 = vadd.f32 %v931, %v668
        %v933 = vadd.f32 %v932, %v671
        %v934 = vadd.f32 %v933, %v673
        %v935 = vadd.f32 %v934, %v676
        %v936 = vadd.f32 %v935, %v678
        %v937 = vadd.f32 %v936, %v681
        %v938 = vadd.f32 %v937, %v683
        %v939 = vadd.f32 %v938, %v686
        %v940 = vadd.f32 %v939, %v688
        %v941 = vadd.f32 %v940, %v691
        %v942 = vadd.f32 %v941, %v693
        %v943 = vadd.f32 %v942, %v696
        %v944 = vadd.f32 %v943, %v698
        %v945 = vadd.f32 %v944, %v701
        %v946 = vadd.f32 %v945, %v703
        %v947 = vadd.f32 %v946, %v706
        %v948 = vadd.f32 %v947, %v708
        %v949 = vadd.f32 %v948, %v711
        %v950 = vadd.f32 %v949, %v713
        %v951 = vadd.f32 %v950, %v716
        %v952 = vadd.f32 %v951, %v718
        %v953 = vadd.f32 %v952, %v721
        %v954 = vadd.f32 %v953, %v723
        %v955 = vadd.f32 %v954, %v726
        %v956 = vadd.f32 %v955, %v728
        %v957 = vadd.f32 %v956, %v731
        %v958 = vadd.f32 %v957, %v733
        %v959 = vadd.f32 %v958, %v736
        %v960 = vadd.f32 %v959, %v738
        %v961 = vadd.f32 %v960, %v741
        %v962 = vadd.f32 %v961, %v743
        %v963 = vadd.f32 %v962, %v746
        %v964 = vadd.f32 %v963, %v748
        %v965 = vadd.f32 %v964, %v751
        %v966 = vadd.f32 %v965, %v753
        %v967 = vadd.f32 %v966, %v756
        %v968 = vadd.f32 %v967, %v758
        %v969 = vadd.f32 %v968, %v761
        %v970 = vadd.f32 %v969, %v763
        %v971 = vadd.f32 %v970, %v766
        %v972 = vadd.f32 %v971, %v768
        %v973 = vrot.slane %v972, 4
        %v974 = vadd.f32 %v972, %v973
        %v975 = vrot.slane %v974, 2
        %v976 = vadd.f32 %v974, %v975
        %v977 = vrot.slane %v976, 1
        %v978 = vadd.f32 %v976, %v977
        %v979 = vadd.f32 %v909, %v978
        %980 = vst [vmem:[#allocation2] sm:$0x1] %v979
        %v981 = vld [vmem:[#allocation3] sm:$0x1]
        %v982 = vmul.f32 %v611, %v611
        %v983 = vmul.f32 %v613, %v613
        %v984 = vmul.f32 %v616, %v616
        %v985 = vmul.f32 %v618, %v618
        %v986 = vmul.f32 %v621, %v621
        %v987 = vmul.f32 %v623, %v623
        %v988 = vmul.f32 %v626, %v626
        %v989 = vmul.f32 %v628, %v628
        %v990 = vmul.f32 %v631, %v631
        %v991 = vmul.f32 %v633, %v633
        %v992 = vmul.f32 %v636, %v636
        %v993 = vmul.f32 %v638, %v638
        %v994 = vmul.f32 %v641, %v641
        %v995 = vmul.f32 %v643, %v643
        %v996 = vmul.f32 %v646, %v646
        %v997 = vmul.f32 %v648, %v648
        %v998 = vmul.f32 %v651, %v651
        %v999 = vmul.f32 %v653, %v653
        %v1000 = vmul.f32 %v656, %v656
        %v1001 = vmul.f32 %v658, %v658
        %v1002 = vmul.f32 %v661, %v661
        %v1003 = vmul.f32 %v663, %v663
        %v1004 = vmul.f32 %v666, %v666
        %v1005 = vmul.f32 %v668, %v668
        %v1006 = vmul.f32 %v671, %v671
        %v1007 = vmul.f32 %v673, %v673
        %v1008 = vmul.f32 %v676, %v676
        %v1009 = vmul.f32 %v678, %v678
        %v1010 = vmul.f32 %v681, %v681
        %v1011 = vmul.f32 %v683, %v683
        %v1012 = vmul.f32 %v686, %v686
        %v1013 = vmul.f32 %v688, %v688
        %v1014 = vmul.f32 %v691, %v691
        %v1015 = vmul.f32 %v693, %v693
        %v1016 = vmul.f32 %v696, %v696
        %v1017 = vmul.f32 %v698, %v698
        %v1018 = vmul.f32 %v701, %v701
        %v1019 = vmul.f32 %v703, %v703
        %v1020 = vmul.f32 %v706, %v706
        %v1021 = vmul.f32 %v708, %v708
        %v1022 = vmul.f32 %v711, %v711
        %v1023 = vmul.f32 %v713, %v713
        %v1024 = vmul.f32 %v716, %v716
        %v1025 = vmul.f32 %v718, %v718
        %v1026 = vmul.f32 %v721, %v721
        %v1027 = vmul.f32 %v723, %v723
        %v1028 = vmul.f32 %v726, %v726
        %v1029 = vmul.f32 %v728, %v728
        %v1030 = vmul.f32 %v731, %v731
        %v1031 = vmul.f32 %v733, %v733
        %v1032 = vmul.f32 %v736, %v736
        %v1033 = vmul.f32 %v738, %v738
        %v1034 = vmul.f32 %v741, %v741
        %v1035 = vmul.f32 %v743, %v743
        %v1036 = vmul.f32 %v746, %v746
        %v1037 = vmul.f32 %v748, %v748
        %v1038 = vmul.f32 %v751, %v751
        %v1039 = vmul.f32 %v753, %v753
        %v1040 = vmul.f32 %v756, %v756
        %v1041 = vmul.f32 %v758, %v758
        %v1042 = vmul.f32 %v761, %v761
        %v1043 = vmul.f32 %v763, %v763
        %v1044 = vmul.f32 %v766, %v766
        %v1045 = vmul.f32 %v768, %v768
        %v1046 = vadd.f32 %v982, %v983
        %v1047 = vadd.f32 %v1046, %v984
        %v1048 = vadd.f32 %v1047, %v985
        %v1049 = vadd.f32 %v1048, %v986
        %v1050 = vadd.f32 %v1049, %v987
        %v1051 = vadd.f32 %v1050, %v988
        %v1052 = vadd.f32 %v1051, %v989
        %v1053 = vadd.f32 %v1052, %v990
        %v1054 = vadd.f32 %v1053, %v991
        %v1055 = vadd.f32 %v1054, %v992
        %v1056 = vadd.f32 %v1055, %v993
        %v1057 = vadd.f32 %v1056, %v994
        %v1058 = vadd.f32 %v1057, %v995
        %v1059 = vadd.f32 %v1058, %v996
        %v1060 = vadd.f32 %v1059, %v997
        %v1061 = vadd.f32 %v1060, %v998
        %v1062 = vadd.f32 %v1061, %v999
        %v1063 = vadd.f32 %v1062, %v1000
        %v1064 = vadd.f32 %v1063, %v1001
        %v1065 = vadd.f32 %v1064, %v1002
        %v1066 = vadd.f32 %v1065, %v1003
        %v1067 = vadd.f32 %v1066, %v1004
        %v1068 = vadd.f32 %v1067, %v1005
        %v1069 = vadd.f32 %v1068, %v1006
        %v1070 = vadd.f32 %v1069, %v1007
        %v1071 = vadd.f32 %v1070, %v1008
        %v1072 = vadd.f32 %v1071, %v1009
        %v1073 = vadd.f32 %v1072, %v1010
        %v1074 = vadd.f32 %v1073, %v1011
        %v1075 = vadd.f32 %v1074, %v1012
        %v1076 = vadd.f32 %v1075, %v1013
        %v1077 = vadd.f32 %v1076, %v1014
        %v1078 = vadd.f32 %v1077, %v1015
        %v1079 = vadd.f32 %v1078, %v1016
        %v1080 = vadd.f32 %v1079, %v1017
        %v1081 = vadd.f32 %v1080, %v1018
        %v1082 = vadd.f32 %v1081, %v1019
        %v1083 = vadd.f32 %v1082, %v1020
        %v1084 = vadd.f32 %v1083, %v1021
        %v1085 = vadd.f32 %v1084, %v1022
        %v1086 = vadd.f32 %v1085, %v1023
        %v1087 = vadd.f32 %v1086, %v1024
        %v1088 = vadd.f32 %v1087, %v1025
        %v1089 = vadd.f32 %v1088, %v1026
        %v1090 = vadd.f32 %v1089, %v1027
        %v1091 = vadd.f32 %v1090, %v1028
        %v1092 = vadd.f32 %v1091, %v1029
        %v1093 = vadd.f32 %v1092, %v1030
        %v1094 = vadd.f32 %v1093, %v1031
        %v1095 = vadd.f32 %v1094, %v1032
        %v1096 = vadd.f32 %v1095, %v1033
        %v1097 = vadd.f32 %v1096, %v1034
        %v1098 = vadd.f32 %v1097, %v1035
        %v1099 = vadd.f32 %v1098, %v1036
        %v1100 = vadd.f32 %v1099, %v1037
        %v1101 = vadd.f32 %v1100, %v1038
        %v1102 = vadd.f32 %v1101, %v1039
        %v1103 = vadd.f32 %v1102, %v1040
        %v1104 = vadd.f32 %v1103, %v1041
        %v1105 = vadd.f32 %v1104, %v1042
        %v1106 = vadd.f32 %v1105, %v1043
        %v1107 = vadd.f32 %v1106, %v1044
        %v1108 = vadd.f32 %v1107, %v1045
        %v1109 = vrot.slane %v1108, 4
        %v1110 = vadd.f32 %v1108, %v1109
        %v1111 = vrot.slane %v1110, 2
        %v1112 = vadd.f32 %v1110, %v1111
        %v1113 = vrot.slane %v1112, 1
        %v1114 = vadd.f32 %v1112, %v1113
        %v1115 = vadd.f32 %v981, %v1114
        %1116 = vst [vmem:[#allocation3] sm:$0x1] %v1115
        %p1117 = scmp.eq.s32.totalorder %s23, 15
        // Predicated region
        $region61: #{tpu_custom_call.1} parent=39 // pred_check
          %p1118 = pneg %p1117
        $region62: #{tpu_custom_call.1} parent=39 // pred_check_branch
          %1120 = sbr.rel (%p1118) target = $region64
        $region63: #{tpu_custom_call.1} parent=39 // pred_region
          %v1121 = vld [vmem:[#allocation2] sm:$0x1]
          %v1122 = vmul.f32 %v1121, 0.00012207031
          %v1123 = vld [vmem:[#allocation3] sm:$0x1]
          %v1124 = vmul.f32 %v1123, 0.00012207031
          %v1125 = vmul.f32 %v1122, %v1122
          %v1126 = vsub.f32 %v1124, %v1125
          %v1127 = vmax.f32 %v1126, 0.0
          %v1128 = vadd.f32 %v1127, 1e-05
          %v1129 = vrsqrt.pop %v1128
          %v1130 = vmul.f32 %v1129, %v1128
          %v1131 = vmul.f32 %v1130, %v1129
          %v1132 = vmul.f32 0.5, %v1131
          %v1133 = vsub.f32 1.5, %v1132
          %v1134 = vmul.f32 %v1129, %v1133
          %vm1135 = vweird.f32 %v1128
          %vm1136 = vweird.f32 %v1129
          %vm1137 = vmor %vm1135, %vm1136
          %v1138 = vsel %vm1137, %v1129, %v1134
          %v1139 = vld [vmem:[#allocation10] sm:$0x1]
          %v1140 = vmul.f32 %v1138, %v1139
          %v1141 = vld [vmem:[#allocation11] sm:$0x1]
          %v1142 = vmul.f32 %v1122, %v1140
          %v1143 = vsub.f32 %v1141, %v1142
          %s1144 = sld [smem:[#allocation4]]
          loop: start=0, step=1, limit=16
          $region65: #{tpu_custom_call.1} parent=63 // loop_pre_header
            _
          $region66: #{tpu_custom_call.1} parent=63 // loop_header
            %s1146 = sphi 0, %s1150
            %p1147 = scmp.ge.s32.totalorder %s1146, 16
          $region67: #{tpu_custom_call.1} parent=63 // loop_header_branch
            %1149 = sbr.rel (%p1147) target = $region71
          $region68: #{tpu_custom_call.1} parent=63 // loop_body
            %s1151 = smul.u32 %s1146, 512
            %s1152 = sshra.s32 %s1151, 3
            %s1153 = sand.u32 %s1151, 7
            %s1154 = smul.addr %s1152, 4
            %s1155 = scalar_lea.vmem [#allocation13], %s1154
            %v1156 = vld [vmem:[%s1155] sm:$0xf]
            %v1157 = vld [vmem:[%s1155 + $0x4] sm:$0xf]
            %v1158 = vld [vmem:[%s1155 + $0x8] sm:$0xf]
            %v1159 = vld [vmem:[%s1155 + $0xc] sm:$0xf]
            %v1160 = vld [vmem:[%s1155 + $0x10] sm:$0xf]
            %v1161 = vld [vmem:[%s1155 + $0x14] sm:$0xf]
            %v1162 = vld [vmem:[%s1155 + $0x18] sm:$0xf]
            %v1163 = vld [vmem:[%s1155 + $0x1c] sm:$0xf]
            %v1164 = vld [vmem:[%s1155 + $0x20] sm:$0xf]
            %v1165 = vld [vmem:[%s1155 + $0x24] sm:$0xf]
            %v1166 = vld [vmem:[%s1155 + $0x28] sm:$0xf]
            %v1167 = vld [vmem:[%s1155 + $0x2c] sm:$0xf]
            %v1168 = vld [vmem:[%s1155 + $0x30] sm:$0xf]
            %v1169 = vld [vmem:[%s1155 + $0x34] sm:$0xf]
            %v1170 = vld [vmem:[%s1155 + $0x38] sm:$0xf]
            %v1171 = vld [vmem:[%s1155 + $0x3c] sm:$0xf]
            %v1172 = vld [vmem:[%s1155 + $0x40] sm:$0xf]
            %v1173 = vld [vmem:[%s1155 + $0x44] sm:$0xf]
            %v1174 = vld [vmem:[%s1155 + $0x48] sm:$0xf]
            %v1175 = vld [vmem:[%s1155 + $0x4c] sm:$0xf]
            %v1176 = vld [vmem:[%s1155 + $0x50] sm:$0xf]
            %v1177 = vld [vmem:[%s1155 + $0x54] sm:$0xf]
            %v1178 = vld [vmem:[%s1155 + $0x58] sm:$0xf]
            %v1179 = vld [vmem:[%s1155 + $0x5c] sm:$0xf]
            %v1180 = vld [vmem:[%s1155 + $0x60] sm:$0xf]
            %v1181 = vld [vmem:[%s1155 + $0x64] sm:$0xf]
            %v1182 = vld [vmem:[%s1155 + $0x68] sm:$0xf]
            %v1183 = vld [vmem:[%s1155 + $0x6c] sm:$0xf]
            %v1184 = vld [vmem:[%s1155 + $0x70] sm:$0xf]
            %v1185 = vld [vmem:[%s1155 + $0x74] sm:$0xf]
            %v1186 = vld [vmem:[%s1155 + $0x78] sm:$0xf]
            %v1187 = vld [vmem:[%s1155 + $0x7c] sm:$0xf]
            %v1188 = vld [vmem:[%s1155 + $0x80] sm:$0xf]
            %v1189 = vld [vmem:[%s1155 + $0x84] sm:$0xf]
            %v1190 = vld [vmem:[%s1155 + $0x88] sm:$0xf]
            %v1191 = vld [vmem:[%s1155 + $0x8c] sm:$0xf]
            %v1192 = vld [vmem:[%s1155 + $0x90] sm:$0xf]
            %v1193 = vld [vmem:[%s1155 + $0x94] sm:$0xf]
            %v1194 = vld [vmem:[%s1155 + $0x98] sm:$0xf]
            %v1195 = vld [vmem:[%s1155 + $0x9c] sm:$0xf]
            %v1196 = vld [vmem:[%s1155 + $0xa0] sm:$0xf]
            %v1197 = vld [vmem:[%s1155 + $0xa4] sm:$0xf]
            %v1198 = vld [vmem:[%s1155 + $0xa8] sm:$0xf]
            %v1199 = vld [vmem:[%s1155 + $0xac] sm:$0xf]
            %v1200 = vld [vmem:[%s1155 + $0xb0] sm:$0xf]
            %v1201 = vld [vmem:[%s1155 + $0xb4] sm:$0xf]
            %v1202 = vld [vmem:[%s1155 + $0xb8] sm:$0xf]
            %v1203 = vld [vmem:[%s1155 + $0xbc] sm:$0xf]
            %v1204 = vld [vmem:[%s1155 + $0xc0] sm:$0xf]
            %v1205 = vld [vmem:[%s1155 + $0xc4] sm:$0xf]
            %v1206 = vld [vmem:[%s1155 + $0xc8] sm:$0xf]
            %v1207 = vld [vmem:[%s1155 + $0xcc] sm:$0xf]
            %v1208 = vld [vmem:[%s1155 + $0xd0] sm:$0xf]
            %v1209 = vld [vmem:[%s1155 + $0xd4] sm:$0xf]
            %v1210 = vld [vmem:[%s1155 + $0xd8] sm:$0xf]
            %v1211 = vld [vmem:[%s1155 + $0xdc] sm:$0xf]
            %v1212 = vld [vmem:[%s1155 + $0xe0] sm:$0xf]
            %v1213 = vld [vmem:[%s1155 + $0xe4] sm:$0xf]
            %v1214 = vld [vmem:[%s1155 + $0xe8] sm:$0xf]
            %v1215 = vld [vmem:[%s1155 + $0xec] sm:$0xf]
            %v1216 = vld [vmem:[%s1155 + $0xf0] sm:$0xf]
            %v1217 = vld [vmem:[%s1155 + $0xf4] sm:$0xf]
            %v1218 = vld [vmem:[%s1155 + $0xf8] sm:$0xf]
            %v1219 = vld [vmem:[%s1155 + $0xfc] sm:$0xf]
            %v1220 = vunpack.c.l.bf16 %v1156
            %v1221 = vunpack.c.l.bf16 %v1157
            %v1222 = vunpack.c.l.bf16 %v1158
            %v1223 = vunpack.c.l.bf16 %v1159
            %v1224 = vunpack.c.l.bf16 %v1160
            %v1225 = vunpack.c.l.bf16 %v1161
            %v1226 = vunpack.c.l.bf16 %v1162
            %v1227 = vunpack.c.l.bf16 %v1163
            %v1228 = vunpack.c.l.bf16 %v1164
            %v1229 = vunpack.c.l.bf16 %v1165
            %v1230 = vunpack.c.l.bf16 %v1166
            %v1231 = vunpack.c.l.bf16 %v1167
            %v1232 = vunpack.c.l.bf16 %v1168
            %v1233 = vunpack.c.l.bf16 %v1169
            %v1234 = vunpack.c.l.bf16 %v1170
            %v1235 = vunpack.c.l.bf16 %v1171
            %v1236 = vunpack.c.l.bf16 %v1172
            %v1237 = vunpack.c.l.bf16 %v1173
            %v1238 = vunpack.c.l.bf16 %v1174
            %v1239 = vunpack.c.l.bf16 %v1175
            %v1240 = vunpack.c.l.bf16 %v1176
            %v1241 = vunpack.c.l.bf16 %v1177
            %v1242 = vunpack.c.l.bf16 %v1178
            %v1243 = vunpack.c.l.bf16 %v1179
            %v1244 = vunpack.c.l.bf16 %v1180
            %v1245 = vunpack.c.l.bf16 %v1181
            %v1246 = vunpack.c.l.bf16 %v1182
            %v1247 = vunpack.c.l.bf16 %v1183
            %v1248 = vunpack.c.l.bf16 %v1184
            %v1249 = vunpack.c.l.bf16 %v1185
            %v1250 = vunpack.c.l.bf16 %v1186
            %v1251 = vunpack.c.l.bf16 %v1187
            %v1252 = vunpack.c.l.bf16 %v1188
            %v1253 = vunpack.c.l.bf16 %v1189
            %v1254 = vunpack.c.l.bf16 %v1190
            %v1255 = vunpack.c.l.bf16 %v1191
            %v1256 = vunpack.c.l.bf16 %v1192
            %v1257 = vunpack.c.l.bf16 %v1193
            %v1258 = vunpack.c.l.bf16 %v1194
            %v1259 = vunpack.c.l.bf16 %v1195
            %v1260 = vunpack.c.l.bf16 %v1196
            %v1261 = vunpack.c.l.bf16 %v1197
            %v1262 = vunpack.c.l.bf16 %v1198
            %v1263 = vunpack.c.l.bf16 %v1199
            %v1264 = vunpack.c.l.bf16 %v1200
            %v1265 = vunpack.c.l.bf16 %v1201
            %v1266 = vunpack.c.l.bf16 %v1202
            %v1267 = vunpack.c.l.bf16 %v1203
            %v1268 = vunpack.c.l.bf16 %v1204
            %v1269 = vunpack.c.l.bf16 %v1205
            %v1270 = vunpack.c.l.bf16 %v1206
            %v1271 = vunpack.c.l.bf16 %v1207
            %v1272 = vunpack.c.l.bf16 %v1208
            %v1273 = vunpack.c.l.bf16 %v1209
            %v1274 = vunpack.c.l.bf16 %v1210
            %v1275 = vunpack.c.l.bf16 %v1211
            %v1276 = vunpack.c.l.bf16 %v1212
            %v1277 = vunpack.c.l.bf16 %v1213
            %v1278 = vunpack.c.l.bf16 %v1214
            %v1279 = vunpack.c.l.bf16 %v1215
            %v1280 = vunpack.c.l.bf16 %v1216
            %v1281 = vunpack.c.l.bf16 %v1217
            %v1282 = vunpack.c.l.bf16 %v1218
            %v1283 = vunpack.c.l.bf16 %v1219
            %v1285 = vperm.slane %v1140, 0
            %v1287 = vmul.f32 %v1220, %v1285
            %v1288 = vmul.f32 %v1221, %v1285
            %v1289 = vmul.f32 %v1222, %v1285
            %v1290 = vmul.f32 %v1223, %v1285
            %v1291 = vmul.f32 %v1224, %v1285
            %v1292 = vmul.f32 %v1225, %v1285
            %v1293 = vmul.f32 %v1226, %v1285
            %v1294 = vmul.f32 %v1227, %v1285
            %v1295 = vmul.f32 %v1228, %v1285
            %v1296 = vmul.f32 %v1229, %v1285
            %v1297 = vmul.f32 %v1230, %v1285
            %v1298 = vmul.f32 %v1231, %v1285
            %v1299 = vmul.f32 %v1232, %v1285
            %v1300 = vmul.f32 %v1233, %v1285
            %v1301 = vmul.f32 %v1234, %v1285
            %v1302 = vmul.f32 %v1235, %v1285
            %v1303 = vmul.f32 %v1236, %v1285
            %v1304 = vmul.f32 %v1237, %v1285
            %v1305 = vmul.f32 %v1238, %v1285
            %v1306 = vmul.f32 %v1239, %v1285
            %v1307 = vmul.f32 %v1240, %v1285
            %v1308 = vmul.f32 %v1241, %v1285
            %v1309 = vmul.f32 %v1242, %v1285
            %v1310 = vmul.f32 %v1243, %v1285
            %v1311 = vmul.f32 %v1244, %v1285
            %v1312 = vmul.f32 %v1245, %v1285
            %v1313 = vmul.f32 %v1246, %v1285
            %v1314 = vmul.f32 %v1247, %v1285
            %v1315 = vmul.f32 %v1248, %v1285
            %v1316 = vmul.f32 %v1249, %v1285
            %v1317 = vmul.f32 %v1250, %v1285
            %v1318 = vmul.f32 %v1251, %v1285
            %v1319 = vmul.f32 %v1252, %v1285
            %v1320 = vmul.f32 %v1253, %v1285
            %v1321 = vmul.f32 %v1254, %v1285
            %v1322 = vmul.f32 %v1255, %v1285
            %v1323 = vmul.f32 %v1256, %v1285
            %v1324 = vmul.f32 %v1257, %v1285
            %v1325 = vmul.f32 %v1258, %v1285
            %v1326 = vmul.f32 %v1259, %v1285
            %v1327 = vmul.f32 %v1260, %v1285
            %v1328 = vmul.f32 %v1261, %v1285
            %v1329 = vmul.f32 %v1262, %v1285
            %v1330 = vmul.f32 %v1263, %v1285
            %v1331 = vmul.f32 %v1264, %v1285
            %v1332 = vmul.f32 %v1265, %v1285
            %v1333 = vmul.f32 %v1266, %v1285
            %v1334 = vmul.f32 %v1267, %v1285
            %v1335 = vmul.f32 %v1268, %v1285
            %v1336 = vmul.f32 %v1269, %v1285
            %v1337 = vmul.f32 %v1270, %v1285
            %v1338 = vmul.f32 %v1271, %v1285
            %v1339 = vmul.f32 %v1272, %v1285
            %v1340 = vmul.f32 %v1273, %v1285
            %v1341 = vmul.f32 %v1274, %v1285
            %v1342 = vmul.f32 %v1275, %v1285
            %v1343 = vmul.f32 %v1276, %v1285
            %v1344 = vmul.f32 %v1277, %v1285
            %v1345 = vmul.f32 %v1278, %v1285
            %v1346 = vmul.f32 %v1279, %v1285
            %v1347 = vmul.f32 %v1280, %v1285
            %v1348 = vmul.f32 %v1281, %v1285
            %v1349 = vmul.f32 %v1282, %v1285
            %v1350 = vmul.f32 %v1283, %v1285
            %v1352 = vperm.slane %v1143, 0
            %v1354 = vadd.f32 %v1287, %v1352
            %v1355 = vadd.f32 %v1288, %v1352
            %v1356 = vadd.f32 %v1289, %v1352
            %v1357 = vadd.f32 %v1290, %v1352
            %v1358 = vadd.f32 %v1291, %v1352
            %v1359 = vadd.f32 %v1292, %v1352
            %v1360 = vadd.f32 %v1293, %v1352
            %v1361 = vadd.f32 %v1294, %v1352
            %v1362 = vadd.f32 %v1295, %v1352
            %v1363 = vadd.f32 %v1296, %v1352
            %v1364 = vadd.f32 %v1297, %v1352
            %v1365 = vadd.f32 %v1298, %v1352
            %v1366 = vadd.f32 %v1299, %v1352
            %v1367 = vadd.f32 %v1300, %v1352
            %v1368 = vadd.f32 %v1301, %v1352
            %v1369 = vadd.f32 %v1302, %v1352
            %v1370 = vadd.f32 %v1303, %v1352
            %v1371 = vadd.f32 %v1304, %v1352
            %v1372 = vadd.f32 %v1305, %v1352
            %v1373 = vadd.f32 %v1306, %v1352
            %v1374 = vadd.f32 %v1307, %v1352
            %v1375 = vadd.f32 %v1308, %v1352
            %v1376 = vadd.f32 %v1309, %v1352
            %v1377 = vadd.f32 %v1310, %v1352
            %v1378 = vadd.f32 %v1311, %v1352
            %v1379 = vadd.f32 %v1312, %v1352
            %v1380 = vadd.f32 %v1313, %v1352
            %v1381 = vadd.f32 %v1314, %v1352
            %v1382 = vadd.f32 %v1315, %v1352
            %v1383 = vadd.f32 %v1316, %v1352
            %v1384 = vadd.f32 %v1317, %v1352
            %v1385 = vadd.f32 %v1318, %v1352
            %v1386 = vadd.f32 %v1319, %v1352
            %v1387 = vadd.f32 %v1320, %v1352
            %v1388 = vadd.f32 %v1321, %v1352
            %v1389 = vadd.f32 %v1322, %v1352
            %v1390 = vadd.f32 %v1323, %v1352
            %v1391 = vadd.f32 %v1324, %v1352
            %v1392 = vadd.f32 %v1325, %v1352
            %v1393 = vadd.f32 %v1326, %v1352
            %v1394 = vadd.f32 %v1327, %v1352
            %v1395 = vadd.f32 %v1328, %v1352
            %v1396 = vadd.f32 %v1329, %v1352
            %v1397 = vadd.f32 %v1330, %v1352
            %v1398 = vadd.f32 %v1331, %v1352
            %v1399 = vadd.f32 %v1332, %v1352
            %v1400 = vadd.f32 %v1333, %v1352
            %v1401 = vadd.f32 %v1334, %v1352
            %v1402 = vadd.f32 %v1335, %v1352
            %v1403 = vadd.f32 %v1336, %v1352
            %v1404 = vadd.f32 %v1337, %v1352
            %v1405 = vadd.f32 %v1338, %v1352
            %v1406 = vadd.f32 %v1339, %v1352
            %v1407 = vadd.f32 %v1340, %v1352
            %v1408 = vadd.f32 %v1341, %v1352
            %v1409 = vadd.f32 %v1342, %v1352
            %v1410 = vadd.f32 %v1343, %v1352
            %v1411 = vadd.f32 %v1344, %v1352
            %v1412 = vadd.f32 %v1345, %v1352
            %v1413 = vadd.f32 %v1346, %v1352
            %v1414 = vadd.f32 %v1347, %v1352
            %v1415 = vadd.f32 %v1348, %v1352
            %v1416 = vadd.f32 %v1349, %v1352
            %v1417 = vadd.f32 %v1350, %v1352
            %vm1418 = vcmp.ge.f32.partialorder %v1354, 0.0
            %vm1419 = vcmp.ge.f32.partialorder %v1355, 0.0
            %vm1420 = vcmp.ge.f32.partialorder %v1356, 0.0
            %vm1421 = vcmp.ge.f32.partialorder %v1357, 0.0
            %vm1422 = vcmp.ge.f32.partialorder %v1358, 0.0
            %vm1423 = vcmp.ge.f32.partialorder %v1359, 0.0
            %vm1424 = vcmp.ge.f32.partialorder %v1360, 0.0
            %vm1425 = vcmp.ge.f32.partialorder %v1361, 0.0
            %vm1426 = vcmp.ge.f32.partialorder %v1362, 0.0
            %vm1427 = vcmp.ge.f32.partialorder %v1363, 0.0
            %vm1428 = vcmp.ge.f32.partialorder %v1364, 0.0
            %vm1429 = vcmp.ge.f32.partialorder %v1365, 0.0
            %vm1430 = vcmp.ge.f32.partialorder %v1366, 0.0
            %vm1431 = vcmp.ge.f32.partialorder %v1367, 0.0
            %vm1432 = vcmp.ge.f32.partialorder %v1368, 0.0
            %vm1433 = vcmp.ge.f32.partialorder %v1369, 0.0
            %vm1434 = vcmp.ge.f32.partialorder %v1370, 0.0
            %vm1435 = vcmp.ge.f32.partialorder %v1371, 0.0
            %vm1436 = vcmp.ge.f32.partialorder %v1372, 0.0
            %vm1437 = vcmp.ge.f32.partialorder %v1373, 0.0
            %vm1438 = vcmp.ge.f32.partialorder %v1374, 0.0
            %vm1439 = vcmp.ge.f32.partialorder %v1375, 0.0
            %vm1440 = vcmp.ge.f32.partialorder %v1376, 0.0
            %vm1441 = vcmp.ge.f32.partialorder %v1377, 0.0
            %vm1442 = vcmp.ge.f32.partialorder %v1378, 0.0
            %vm1443 = vcmp.ge.f32.partialorder %v1379, 0.0
            %vm1444 = vcmp.ge.f32.partialorder %v1380, 0.0
            %vm1445 = vcmp.ge.f32.partialorder %v1381, 0.0
            %vm1446 = vcmp.ge.f32.partialorder %v1382, 0.0
            %vm1447 = vcmp.ge.f32.partialorder %v1383, 0.0
            %vm1448 = vcmp.ge.f32.partialorder %v1384, 0.0
            %vm1449 = vcmp.ge.f32.partialorder %v1385, 0.0
            %vm1450 = vcmp.ge.f32.partialorder %v1386, 0.0
            %vm1451 = vcmp.ge.f32.partialorder %v1387, 0.0
            %vm1452 = vcmp.ge.f32.partialorder %v1388, 0.0
            %vm1453 = vcmp.ge.f32.partialorder %v1389, 0.0
            %vm1454 = vcmp.ge.f32.partialorder %v1390, 0.0
            %vm1455 = vcmp.ge.f32.partialorder %v1391, 0.0
            %vm1456 = vcmp.ge.f32.partialorder %v1392, 0.0
            %vm1457 = vcmp.ge.f32.partialorder %v1393, 0.0
            %vm1458 = vcmp.ge.f32.partialorder %v1394, 0.0
            %vm1459 = vcmp.ge.f32.partialorder %v1395, 0.0
            %vm1460 = vcmp.ge.f32.partialorder %v1396, 0.0
            %vm1461 = vcmp.ge.f32.partialorder %v1397, 0.0
            %vm1462 = vcmp.ge.f32.partialorder %v1398, 0.0
            %vm1463 = vcmp.ge.f32.partialorder %v1399, 0.0
            %vm1464 = vcmp.ge.f32.partialorder %v1400, 0.0
            %vm1465 = vcmp.ge.f32.partialorder %v1401, 0.0
            %vm1466 = vcmp.ge.f32.partialorder %v1402, 0.0
            %vm1467 = vcmp.ge.f32.partialorder %v1403, 0.0
            %vm1468 = vcmp.ge.f32.partialorder %v1404, 0.0
            %vm1469 = vcmp.ge.f32.partialorder %v1405, 0.0
            %vm1470 = vcmp.ge.f32.partialorder %v1406, 0.0
            %vm1471 = vcmp.ge.f32.partialorder %v1407, 0.0
            %vm1472 = vcmp.ge.f32.partialorder %v1408, 0.0
            %vm1473 = vcmp.ge.f32.partialorder %v1409, 0.0
            %vm1474 = vcmp.ge.f32.partialorder %v1410, 0.0
            %vm1475 = vcmp.ge.f32.partialorder %v1411, 0.0
            %vm1476 = vcmp.ge.f32.partialorder %v1412, 0.0
            %vm1477 = vcmp.ge.f32.partialorder %v1413, 0.0
            %vm1478 = vcmp.ge.f32.partialorder %v1414, 0.0
            %vm1479 = vcmp.ge.f32.partialorder %v1415, 0.0
            %vm1480 = vcmp.ge.f32.partialorder %v1416, 0.0
            %vm1481 = vcmp.ge.f32.partialorder %v1417, 0.0
            %v1482 = vstv %s1144
            %v1483 = vmul.f32 %v1482, %v1354
            %v1484 = vmul.f32 %v1482, %v1355
            %v1485 = vmul.f32 %v1482, %v1356
            %v1486 = vmul.f32 %v1482, %v1357
            %v1487 = vmul.f32 %v1482, %v1358
            %v1488 = vmul.f32 %v1482, %v1359
            %v1489 = vmul.f32 %v1482, %v1360
            %v1490 = vmul.f32 %v1482, %v1361
            %v1491 = vmul.f32 %v1482, %v1362
            %v1492 = vmul.f32 %v1482, %v1363
            %v1493 = vmul.f32 %v1482, %v1364
            %v1494 = vmul.f32 %v1482, %v1365
            %v1495 = vmul.f32 %v1482, %v1366
            %v1496 = vmul.f32 %v1482, %v1367
            %v1497 = vmul.f32 %v1482, %v1368
            %v1498 = vmul.f32 %v1482, %v1369
            %v1499 = vmul.f32 %v1482, %v1370
            %v1500 = vmul.f32 %v1482, %v1371
            %v1501 = vmul.f32 %v1482, %v1372
            %v1502 = vmul.f32 %v1482, %v1373
            %v1503 = vmul.f32 %v1482, %v1374
            %v1504 = vmul.f32 %v1482, %v1375
            %v1505 = vmul.f32 %v1482, %v1376
            %v1506 = vmul.f32 %v1482, %v1377
            %v1507 = vmul.f32 %v1482, %v1378
            %v1508 = vmul.f32 %v1482, %v1379
            %v1509 = vmul.f32 %v1482, %v1380
            %v1510 = vmul.f32 %v1482, %v1381
            %v1511 = vmul.f32 %v1482, %v1382
            %v1512 = vmul.f32 %v1482, %v1383
            %v1513 = vmul.f32 %v1482, %v1384
            %v1514 = vmul.f32 %v1482, %v1385
            %v1515 = vmul.f32 %v1482, %v1386
            %v1516 = vmul.f32 %v1482, %v1387
            %v1517 = vmul.f32 %v1482, %v1388
            %v1518 = vmul.f32 %v1482, %v1389
            %v1519 = vmul.f32 %v1482, %v1390
            %v1520 = vmul.f32 %v1482, %v1391
            %v1521 = vmul.f32 %v1482, %v1392
            %v1522 = vmul.f32 %v1482, %v1393
            %v1523 = vmul.f32 %v1482, %v1394
            %v1524 = vmul.f32 %v1482, %v1395
            %v1525 = vmul.f32 %v1482, %v1396
            %v1526 = vmul.f32 %v1482, %v1397
            %v1527 = vmul.f32 %v1482, %v1398
            %v1528 = vmul.f32 %v1482, %v1399
            %v1529 = vmul.f32 %v1482, %v1400
            %v1530 = vmul.f32 %v1482, %v1401
            %v1531 = vmul.f32 %v1482, %v1402
            %v1532 = vmul.f32 %v1482, %v1403
            %v1533 = vmul.f32 %v1482, %v1404
            %v1534 = vmul.f32 %v1482, %v1405
            %v1535 = vmul.f32 %v1482, %v1406
            %v1536 = vmul.f32 %v1482, %v1407
            %v1537 = vmul.f32 %v1482, %v1408
            %v1538 = vmul.f32 %v1482, %v1409
            %v1539 = vmul.f32 %v1482, %v1410
            %v1540 = vmul.f32 %v1482, %v1411
            %v1541 = vmul.f32 %v1482, %v1412
            %v1542 = vmul.f32 %v1482, %v1413
            %v1543 = vmul.f32 %v1482, %v1414
            %v1544 = vmul.f32 %v1482, %v1415
            %v1545 = vmul.f32 %v1482, %v1416
            %v1546 = vmul.f32 %v1482, %v1417
            %v1547 = vsel %vm1418, %v1354, %v1483
            %v1548 = vsel %vm1419, %v1355, %v1484
            %v1549 = vsel %vm1420, %v1356, %v1485
            %v1550 = vsel %vm1421, %v1357, %v1486
            %v1551 = vsel %vm1422, %v1358, %v1487
            %v1552 = vsel %vm1423, %v1359, %v1488
            %v1553 = vsel %vm1424, %v1360, %v1489
            %v1554 = vsel %vm1425, %v1361, %v1490
            %v1555 = vsel %vm1426, %v1362, %v1491
            %v1556 = vsel %vm1427, %v1363, %v1492
            %v1557 = vsel %vm1428, %v1364, %v1493
            %v1558 = vsel %vm1429, %v1365, %v1494
            %v1559 = vsel %vm1430, %v1366, %v1495
            %v1560 = vsel %vm1431, %v1367, %v1496
            %v1561 = vsel %vm1432, %v1368, %v1497
            %v1562 = vsel %vm1433, %v1369, %v1498
            %v1563 = vsel %vm1434, %v1370, %v1499
            %v1564 = vsel %vm1435, %v1371, %v1500
            %v1565 = vsel %vm1436, %v1372, %v1501
            %v1566 = vsel %vm1437, %v1373, %v1502
            %v1567 = vsel %vm1438, %v1374, %v1503
            %v1568 = vsel %vm1439, %v1375, %v1504
            %v1569 = vsel %vm1440, %v1376, %v1505
            %v1570 = vsel %vm1441, %v1377, %v1506
            %v1571 = vsel %vm1442, %v1378, %v1507
            %v1572 = vsel %vm1443, %v1379, %v1508
            %v1573 = vsel %vm1444, %v1380, %v1509
            %v1574 = vsel %vm1445, %v1381, %v1510
            %v1575 = vsel %vm1446, %v1382, %v1511
            %v1576 = vsel %vm1447, %v1383, %v1512
            %v1577 = vsel %vm1448, %v1384, %v1513
            %v1578 = vsel %vm1449, %v1385, %v1514
            %v1579 = vsel %vm1450, %v1386, %v1515
            %v1580 = vsel %vm1451, %v1387, %v1516
            %v1581 = vsel %vm1452, %v1388, %v1517
            %v1582 = vsel %vm1453, %v1389, %v1518
            %v1583 = vsel %vm1454, %v1390, %v1519
            %v1584 = vsel %vm1455, %v1391, %v1520
            %v1585 = vsel %vm1456, %v1392, %v1521
            %v1586 = vsel %vm1457, %v1393, %v1522
            %v1587 = vsel %vm1458, %v1394, %v1523
            %v1588 = vsel %vm1459, %v1395, %v1524
            %v1589 = vsel %vm1460, %v1396, %v1525
            %v1590 = vsel %vm1461, %v1397, %v1526
            %v1591 = vsel %vm1462, %v1398, %v1527
            %v1592 = vsel %vm1463, %v1399, %v1528
            %v1593 = vsel %vm1464, %v1400, %v1529
            %v1594 = vsel %vm1465, %v1401, %v1530
            %v1595 = vsel %vm1466, %v1402, %v1531
            %v1596 = vsel %vm1467, %v1403, %v1532
            %v1597 = vsel %vm1468, %v1404, %v1533
            %v1598 = vsel %vm1469, %v1405, %v1534
            %v1599 = vsel %vm1470, %v1406, %v1535
            %v1600 = vsel %vm1471, %v1407, %v1536
            %v1601 = vsel %vm1472, %v1408, %v1537
            %v1602 = vsel %vm1473, %v1409, %v1538
            %v1603 = vsel %vm1474, %v1410, %v1539
            %v1604 = vsel %vm1475, %v1411, %v1540
            %v1605 = vsel %vm1476, %v1412, %v1541
            %v1606 = vsel %vm1477, %v1413, %v1542
            %v1607 = vsel %vm1478, %v1414, %v1543
            %v1608 = vsel %vm1479, %v1415, %v1544
            %v1609 = vsel %vm1480, %v1416, %v1545
            %v1610 = vsel %vm1481, %v1417, %v1546
            %v1611 = vpack.c.bf16 %v1547, %v1547
            %v1612 = vpack.c.bf16 %v1548, %v1548
            %v1613 = vpack.c.bf16 %v1549, %v1549
            %v1614 = vpack.c.bf16 %v1550, %v1550
            %v1615 = vpack.c.bf16 %v1551, %v1551
            %v1616 = vpack.c.bf16 %v1552, %v1552
            %v1617 = vpack.c.bf16 %v1553, %v1553
            %v1618 = vpack.c.bf16 %v1554, %v1554
            %v1619 = vpack.c.bf16 %v1555, %v1555
            %v1620 = vpack.c.bf16 %v1556, %v1556
            %v1621 = vpack.c.bf16 %v1557, %v1557
            %v1622 = vpack.c.bf16 %v1558, %v1558
            %v1623 = vpack.c.bf16 %v1559, %v1559
            %v1624 = vpack.c.bf16 %v1560, %v1560
            %v1625 = vpack.c.bf16 %v1561, %v1561
            %v1626 = vpack.c.bf16 %v1562, %v1562
            %v1627 = vpack.c.bf16 %v1563, %v1563
            %v1628 = vpack.c.bf16 %v1564, %v1564
            %v1629 = vpack.c.bf16 %v1565, %v1565
            %v1630 = vpack.c.bf16 %v1566, %v1566
            %v1631 = vpack.c.bf16 %v1567, %v1567
            %v1632 = vpack.c.bf16 %v1568, %v1568
            %v1633 = vpack.c.bf16 %v1569, %v1569
            %v1634 = vpack.c.bf16 %v1570, %v1570
            %v1635 = vpack.c.bf16 %v1571, %v1571
            %v1636 = vpack.c.bf16 %v1572, %v1572
            %v1637 = vpack.c.bf16 %v1573, %v1573
            %v1638 = vpack.c.bf16 %v1574, %v1574
            %v1639 = vpack.c.bf16 %v1575, %v1575
            %v1640 = vpack.c.bf16 %v1576, %v1576
            %v1641 = vpack.c.bf16 %v1577, %v1577
            %v1642 = vpack.c.bf16 %v1578, %v1578
            %v1643 = vpack.c.bf16 %v1579, %v1579
            %v1644 = vpack.c.bf16 %v1580, %v1580
            %v1645 = vpack.c.bf16 %v1581, %v1581
            %v1646 = vpack.c.bf16 %v1582, %v1582
            %v1647 = vpack.c.bf16 %v1583, %v1583
            %v1648 = vpack.c.bf16 %v1584, %v1584
            %v1649 = vpack.c.bf16 %v1585, %v1585
            %v1650 = vpack.c.bf16 %v1586, %v1586
            %v1651 = vpack.c.bf16 %v1587, %v1587
            %v1652 = vpack.c.bf16 %v1588, %v1588
            %v1653 = vpack.c.bf16 %v1589, %v1589
            %v1654 = vpack.c.bf16 %v1590, %v1590
            %v1655 = vpack.c.bf16 %v1591, %v1591
            %v1656 = vpack.c.bf16 %v1592, %v1592
            %v1657 = vpack.c.bf16 %v1593, %v1593
            %v1658 = vpack.c.bf16 %v1594, %v1594
            %v1659 = vpack.c.bf16 %v1595, %v1595
            %v1660 = vpack.c.bf16 %v1596, %v1596
            %v1661 = vpack.c.bf16 %v1597, %v1597
            %v1662 = vpack.c.bf16 %v1598, %v1598
            %v1663 = vpack.c.bf16 %v1599, %v1599
            %v1664 = vpack.c.bf16 %v1600, %v1600
            %v1665 = vpack.c.bf16 %v1601, %v1601
            %v1666 = vpack.c.bf16 %v1602, %v1602
            %v1667 = vpack.c.bf16 %v1603, %v1603
            %v1668 = vpack.c.bf16 %v1604, %v1604
            %v1669 = vpack.c.bf16 %v1605, %v1605
            %v1670 = vpack.c.bf16 %v1606, %v1606
            %v1671 = vpack.c.bf16 %v1607, %v1607
            %v1672 = vpack.c.bf16 %v1608, %v1608
            %v1673 = vpack.c.bf16 %v1609, %v1609
            %v1674 = vpack.c.bf16 %v1610, %v1610
            %1675 = vst [vmem:[%s1155] sm:$0xf] %v1611
            %1676 = vst [vmem:[%s1155 + $0x4] sm:$0xf] %v1612
            %1677 = vst [vmem:[%s1155 + $0x8] sm:$0xf] %v1613
            %1678 = vst [vmem:[%s1155 + $0xc] sm:$0xf] %v1614
            %1679 = vst [vmem:[%s1155 + $0x10] sm:$0xf] %v1615
            %1680 = vst [vmem:[%s1155 + $0x14] sm:$0xf] %v1616
            %1681 = vst [vmem:[%s1155 + $0x18] sm:$0xf] %v1617
            %1682 = vst [vmem:[%s1155 + $0x1c] sm:$0xf] %v1618
            %1683 = vst [vmem:[%s1155 + $0x20] sm:$0xf] %v1619
            %1684 = vst [vmem:[%s1155 + $0x24] sm:$0xf] %v1620
            %1685 = vst [vmem:[%s1155 + $0x28] sm:$0xf] %v1621
            %1686 = vst [vmem:[%s1155 + $0x2c] sm:$0xf] %v1622
            %1687 = vst [vmem:[%s1155 + $0x30] sm:$0xf] %v1623
            %1688 = vst [vmem:[%s1155 + $0x34] sm:$0xf] %v1624
            %1689 = vst [vmem:[%s1155 + $0x38] sm:$0xf] %v1625
            %1690 = vst [vmem:[%s1155 + $0x3c] sm:$0xf] %v1626
            %1691 = vst [vmem:[%s1155 + $0x40] sm:$0xf] %v1627
            %1692 = vst [vmem:[%s1155 + $0x44] sm:$0xf] %v1628
            %1693 = vst [vmem:[%s1155 + $0x48] sm:$0xf] %v1629
            %1694 = vst [vmem:[%s1155 + $0x4c] sm:$0xf] %v1630
            %1695 = vst [vmem:[%s1155 + $0x50] sm:$0xf] %v1631
            %1696 = vst [vmem:[%s1155 + $0x54] sm:$0xf] %v1632
            %1697 = vst [vmem:[%s1155 + $0x58] sm:$0xf] %v1633
            %1698 = vst [vmem:[%s1155 + $0x5c] sm:$0xf] %v1634
            %1699 = vst [vmem:[%s1155 + $0x60] sm:$0xf] %v1635
            %1700 = vst [vmem:[%s1155 + $0x64] sm:$0xf] %v1636
            %1701 = vst [vmem:[%s1155 + $0x68] sm:$0xf] %v1637
            %1702 = vst [vmem:[%s1155 + $0x6c] sm:$0xf] %v1638
            %1703 = vst [vmem:[%s1155 + $0x70] sm:$0xf] %v1639
            %1704 = vst [vmem:[%s1155 + $0x74] sm:$0xf] %v1640
            %1705 = vst [vmem:[%s1155 + $0x78] sm:$0xf] %v1641
            %1706 = vst [vmem:[%s1155 + $0x7c] sm:$0xf] %v1642
            %1707 = vst [vmem:[%s1155 + $0x80] sm:$0xf] %v1643
            %1708 = vst [vmem:[%s1155 + $0x84] sm:$0xf] %v1644
            %1709 = vst [vmem:[%s1155 + $0x88] sm:$0xf] %v1645
            %1710 = vst [vmem:[%s1155 + $0x8c] sm:$0xf] %v1646
            %1711 = vst [vmem:[%s1155 + $0x90] sm:$0xf] %v1647
            %1712 = vst [vmem:[%s1155 + $0x94] sm:$0xf] %v1648
            %1713 = vst [vmem:[%s1155 + $0x98] sm:$0xf] %v1649
            %1714 = vst [vmem:[%s1155 + $0x9c] sm:$0xf] %v1650
            %1715 = vst [vmem:[%s1155 + $0xa0] sm:$0xf] %v1651
            %1716 = vst [vmem:[%s1155 + $0xa4] sm:$0xf] %v1652
            %1717 = vst [vmem:[%s1155 + $0xa8] sm:$0xf] %v1653
            %1718 = vst [vmem:[%s1155 + $0xac] sm:$0xf] %v1654
            %1719 = vst [vmem:[%s1155 + $0xb0] sm:$0xf] %v1655
            %1720 = vst [vmem:[%s1155 + $0xb4] sm:$0xf] %v1656
            %1721 = vst [vmem:[%s1155 + $0xb8] sm:$0xf] %v1657
            %1722 = vst [vmem:[%s1155 + $0xbc] sm:$0xf] %v1658
            %1723 = vst [vmem:[%s1155 + $0xc0] sm:$0xf] %v1659
            %1724 = vst [vmem:[%s1155 + $0xc4] sm:$0xf] %v1660
            %1725 = vst [vmem:[%s1155 + $0xc8] sm:$0xf] %v1661
            %1726 = vst [vmem:[%s1155 + $0xcc] sm:$0xf] %v1662
            %1727 = vst [vmem:[%s1155 + $0xd0] sm:$0xf] %v1663
            %1728 = vst [vmem:[%s1155 + $0xd4] sm:$0xf] %v1664
            %1729 = vst [vmem:[%s1155 + $0xd8] sm:$0xf] %v1665
            %1730 = vst [vmem:[%s1155 + $0xdc] sm:$0xf] %v1666
            %1731 = vst [vmem:[%s1155 + $0xe0] sm:$0xf] %v1667
            %1732 = vst [vmem:[%s1155 + $0xe4] sm:$0xf] %v1668
            %1733 = vst [vmem:[%s1155 + $0xe8] sm:$0xf] %v1669
            %1734 = vst [vmem:[%s1155 + $0xec] sm:$0xf] %v1670
            %1735 = vst [vmem:[%s1155 + $0xf0] sm:$0xf] %v1671
            %1736 = vst [vmem:[%s1155 + $0xf4] sm:$0xf] %v1672
            %1737 = vst [vmem:[%s1155 + $0xf8] sm:$0xf] %v1673
            %1738 = vst [vmem:[%s1155 + $0xfc] sm:$0xf] %v1674
          $region69: #{tpu_custom_call.1} parent=63 // loop_footer
            %s1150 = sadd.s32 1, %s1146
          $region70: #{tpu_custom_call.1} parent=63 // loop_footer_branch
            %1145 = sbr.rel target = $region66
          $region71: #{tpu_custom_call.1} parent=63 // loop_exit
            _
        $region64: #{tpu_custom_call.1} parent=39 // pred_fallthru
          _
        // Predicated region
        $region72: #{tpu_custom_call.1} parent=39 // pred_check
          %p1739 = pneg %p146
        $region73: #{tpu_custom_call.1} parent=39 // pred_check_branch
          %1741 = sbr.rel (%p1739) target = $region75
        $region74: #{tpu_custom_call.1} parent=39 // pred_region
          %1743 = vsyncadd [#allocation7], 0
          %s1744 = sshll.u32 [#allocation13], 4
          %s1745 = int_to_ptr.vmem [resolvable:$true] %s1744
          %s1746 = sshll.u32 %s5, 4
          %s1747 = int_to_ptr.hbm [resolvable:$true] %s1746
          %1752 = dma.vmem_to_hbm [thread:$0]  %s1745, 65536, %s1747, [#allocation7], 64, 64, 4
        $region75: #{tpu_custom_call.1} parent=39 // pred_fallthru
          _
        // Predicated region
        $region76: #{tpu_custom_call.1} parent=39 // pred_check
          %p1753 = pneg %p146
        $region77: #{tpu_custom_call.1} parent=39 // pred_check_branch
          %1755 = sbr.rel (%p1753) target = $region79
        $region78: #{tpu_custom_call.1} parent=39 // pred_region
          %1757 = dma.done [#allocation7], 65536
        $region79: #{tpu_custom_call.1} parent=39 // pred_fallthru
          _
      $region40: #{tpu_custom_call.1} parent=5 // pred_fallthru
        _
      %p1758 = scmp.le.s32.totalorder 2, %s18
      // Predicated region
      $region80: #{tpu_custom_call.1} parent=5 // pred_check
        %p1759 = pneg %p1758
      $region81: #{tpu_custom_call.1} parent=5 // pred_check_branch
        %1761 = sbr.rel (%p1759) target = $region83
      $region82: #{tpu_custom_call.1} parent=5 // pred_region
        %s1762 = ssub.s32 %s18, 2
      $region83: #{tpu_custom_call.1} parent=5 // pred_fallthru
        _
    $region6: #{tpu_custom_call.1} parent=1 // loop_footer
      %s22 = sadd.s32 1, %s18
    $region7: #{tpu_custom_call.1} parent=1 // loop_footer_branch
      %17 = sbr.rel target = $region3
    $region8: #{tpu_custom_call.1} parent=1 // loop_exit
      _
    %1763 = vsyncpa [#allocation6], 1
    %s1764 = scalar_lea.sflag [#allocation6], 1
    %1765 = vsyncpa %s1764, 1
    %1766 = vsyncpa [#allocation9], 1
    %1767 = vsyncpa [#allocation12], 1
    %1768 = vsyncpa [#allocation7], 1
    %s1769 = scalar_lea.sflag [#allocation7], 1
    %1770 = vsyncpa %s1769, 1

</llo_original>
